<compile_context>
chip_gen: v6e
topology: v6e:2x2x1
jax: 0.10.0
libtpu: 0.0.40
codegen_flags: <defaults>
</compile_context>

<pallas_src>
import functools

import numpy as np
import jax
import jax.numpy as jnp
from jax.experimental import pallas as pl
from jax.experimental.pallas import tpu as pltpu

LANE = 128
SUBLANE = 8


def _round_up(x, m):
    return ((x + m - 1) // m) * m


def _conv_out_hw(hw, k, p, s):
    return (hw + 2 * p - k) // s + 1


# ----------------------------------------------------------------------------
# Fused kernel: h = x; for each layer: h = relu(h @ W_l + b_l); out = h
# ----------------------------------------------------------------------------
def _fused_trunk_kernel(*refs, num_layers):
    x_ref, o_ref = refs[0], refs[-1]
    h = x_ref[...]
    for l in range(num_layers):
        w_ref = refs[1 + 2 * l]
        b_ref = refs[2 + 2 * l]
        h = jnp.dot(h, w_ref[...], preferred_element_type=jnp.float32)
        h = jnp.maximum(h + b_ref[...], 0.0)      # bias (1, N) broadcasts
    o_ref[...] = h.astype(o_ref.dtype)


def fused_trunk_apply(x_flat, layers, out_features):
    """Run the whole (pre-transformed) trunk in one pallas_call.

    x_flat: (batch, K0) float32, NCHW-flattened input.
    layers: list of (W, b) with W (Kp, Np) and b (1, Np), feature dims padded
            to multiples of 128 and consecutive layers' Kp/Np matching.
    """
    n, k0 = x_flat.shape
    k0_pad = layers[0][0].shape[0]
    n_last_pad = layers[-1][0].shape[1]

    # Batch/M tiling: one tile for small batches, 256-row tiles otherwise.
    m_pad = _round_up(max(n, SUBLANE), SUBLANE)
    tm = 256 if m_pad >= 256 else m_pad
    m_pad = _round_up(m_pad, tm)

    x_p = jnp.zeros((m_pad, k0_pad), jnp.float32).at[:n, :k0].set(
        x_flat.astype(jnp.float32))

    in_specs = [pl.BlockSpec((tm, k0_pad), lambda i: (i, 0))]   # X row tile
    args = [x_p]
    for w, b in layers:
        kp, np_pad = w.shape
        in_specs.append(pl.BlockSpec((kp, np_pad), lambda i: (0, 0)))  # resident W
        in_specs.append(pl.BlockSpec((1, np_pad), lambda i: (0, 0)))   # resident b
        args.extend([w, b])

    flops = int(sum(2 * m_pad * w.shape[0] * w.shape[1] for w, _ in layers))
    bytes_accessed = int(
        (x_p.size + sum(w.size + b.size for w, b in layers)
         + m_pad * n_last_pad) * 4)

    out = pl.pallas_call(
        functools.partial(_fused_trunk_kernel, num_layers=len(layers)),
        out_shape=jax.ShapeDtypeStruct((m_pad, n_last_pad), jnp.float32),
        grid_spec=pltpu.PrefetchScalarGridSpec(
            num_scalar_prefetch=0,
            grid=(m_pad // tm,),
            in_specs=in_specs,
            out_specs=pl.BlockSpec((tm, n_last_pad), lambda i: (i, 0)),
        ),
        compiler_params=pltpu.CompilerParams(
            dimension_semantics=("parallel",),
            vmem_limit_bytes=32 * 1024 * 1024),
        cost_estimate=pl.CostEstimate(
            flops=flops, transcendentals=0, bytes_accessed=bytes_accessed),
    )(*args)

    # Padded rows/cols are exact zeros-in => relu(bias)/0; slice them off.
    return out[:n, :out_features]


# ----------------------------------------------------------------------------
# One-time parameter pre-transform (outside jit, plain numpy)
# ----------------------------------------------------------------------------
def _unroll_conv(w_oihw, bias, hin, win, stride, pad):
    """Conv2d (zero-padded, strided) as a (Cin*Hin*Win, Cout*Hout*Wout) matrix
    in NCHW flatten order, plus a bias vector replicated over spatial."""
    cout, cin, kh, kw = w_oihw.shape
    hout = _conv_out_hw(hin, kh, pad, stride)
    wout = _conv_out_hw(win, kw, pad, stride)
    mat = np.zeros((cin * hin * win, cout * hout * wout), np.float32)
    ci = np.arange(cin)
    co = np.arange(cout)
    for ki in range(kh):
        for kj in range(kw):
            w_slice = w_oihw[:, :, ki, kj].T          # (cin, cout)
            for ho in range(hout):
                hi = ho * stride + ki - pad
                if hi < 0 or hi >= hin:
                    continue
                for wo in range(wout):
                    wi = wo * stride + kj - pad
                    if wi < 0 or wi >= win:
                        continue
                    rows = ci * (hin * win) + hi * win + wi
                    cols = co * (hout * wout) + ho * wout + wo
                    mat[np.ix_(rows, cols)] = w_slice
    b_full = np.repeat(np.asarray(bias, np.float32), hout * wout)
    return mat, b_full, (hout, wout)


def prepare_params(params, input_shape, conv_strides, conv_paddings):
    """Pre-transform weights once: convs -> unrolled matmul matrices, FC
    (out,in) -> (in,out); zero-pad all feature dims to multiples of 128."""
    _, h, w = input_shape
    layers_np = []
    for (wgt, bias), s, p in zip(params["conv"], conv_strides, conv_paddings):
        mat, b_full, (h, w) = _unroll_conv(np.asarray(wgt), np.asarray(bias),
                                           h, w, s, p)
        layers_np.append((mat, b_full))
    for wgt, bias in params["fc"]:
        layers_np.append((np.asarray(wgt, np.float32).T,     # (in, out)
                          np.asarray(bias, np.float32)))
    out_features = layers_np[-1][0].shape[1]

    padded = []
    for mat, b in layers_np:
        k, n_out = mat.shape
        kp, np_pad = _round_up(k, LANE), _round_up(n_out, LANE)
        mat_p = np.zeros((kp, np_pad), np.float32)
        mat_p[:k, :n_out] = mat
        b_p = np.zeros((1, np_pad), np.float32)
        b_p[0, :n_out] = b
        padded.append((jnp.asarray(mat_p), jnp.asarray(b_p)))
    return padded, out_features


# ----------------------------------------------------------------------------
# ConvMLPTrunk forward (x in NCHW, PyTorch convention)
# ----------------------------------------------------------------------------
def conv_mlp_trunk_forward(x_nchw, fused_layers, out_features):
    n = x_nchw.shape[0]
    # Lambda(float) + BatchFlatten: NCHW flatten order == reshape(n, -1).
    x_flat = x_nchw.astype(jnp.float32).reshape(n, -1)
    return fused_trunk_apply(x_flat, fused_layers, out_features)


# ----------------------------------------------------------------------------
# Synthetic parameters (PyTorch-layout shapes: conv OIHW, linear (out, in))
# ----------------------------------------------------------------------------
def init_params(key, input_shape, conv_out_cs, conv_filter_sizes,
                conv_paddings, conv_strides, fc_hidden_sizes):
    c, h, w = input_shape
    params = {"conv": [], "fc": []}
    in_c = c
    for out_c, k, p, s in zip(conv_out_cs, conv_filter_sizes,
                              conv_paddings, conv_strides):
        key, k1, k2 = jax.random.split(key, 3)
        wgt = jax.random.normal(k1, (out_c, in_c, k, k), jnp.float32) * 0.05
        bias = jax.random.normal(k2, (out_c,), jnp.float32) * 0.05
        params["conv"].append((wgt, bias))
        h, w = _conv_out_hw(h, k, p, s), _conv_out_hw(w, k, p, s)
        in_c = out_c
    prev = in_c * h * w
    for hs in fc_hidden_sizes:
        key, k1, k2 = jax.random.split(key, 3)
        wgt = jax.random.normal(k1, (hs, prev), jnp.float32) * 0.05
        bias = jax.random.normal(k2, (hs,), jnp.float32) * 0.05
        params["fc"].append((wgt, bias))
        prev = hs
    return params


if __name__ == "__main__":
    # Module config (activation = ReLU)
    input_shape = (4, 16, 16)           # (C, H, W)
    conv_out_cs = [8, 16]
    conv_filter_sizes = [3, 3]
    conv_paddings = [1, 1]
    conv_strides = [2, 2]               # 16 -> 8 -> 4 spatial
    fc_hidden_sizes = [32, 32]
    batch = 2

    key = jax.random.PRNGKey(0)
    key, kx = jax.random.split(key)
    x = jax.random.normal(kx, (batch,) + input_shape, jnp.float32)

    params = init_params(key, input_shape, conv_out_cs, conv_filter_sizes,
                         conv_paddings, conv_strides, fc_hidden_sizes)

    # One-time weight pre-transform (not part of the per-forward hot path).
    fused_layers, out_features = prepare_params(params, input_shape,
                                                conv_strides, conv_paddings)

    fwd = jax.jit(functools.partial(conv_mlp_trunk_forward,
                                    out_features=out_features))
    out = fwd(x, fused_layers)
    jax.block_until_ready(out)
    assert out.shape == (batch, fc_hidden_sizes[-1]), out.shape
    assert out.dtype == jnp.float32
    print("KERNEL_OK")
</pallas_src>

<mosaic_0001>
module attributes {stable_mosaic.version = 11 : i64} {
  func.func @_fused_trunk_kernel(%arg0: i32, %arg1: memref<8x1024xf32, #tpu.memory_space<vmem>>, %arg2: memref<1024x512xf32, #tpu.memory_space<vmem>>, %arg3: memref<1x512xf32, #tpu.memory_space<vmem>>, %arg4: memref<512x256xf32, #tpu.memory_space<vmem>>, %arg5: memref<1x256xf32, #tpu.memory_space<vmem>>, %arg6: memref<256x128xf32, #tpu.memory_space<vmem>>, %arg7: memref<1x128xf32, #tpu.memory_space<vmem>>, %arg8: memref<128x128xf32, #tpu.memory_space<vmem>>, %arg9: memref<1x128xf32, #tpu.memory_space<vmem>>, %arg10: memref<8x128xf32, #tpu.memory_space<vmem>>) attributes {dimension_semantics = [#tpu.dimension_semantics<parallel>], iteration_bounds = array<i64: 1>, scalar_prefetch = 0 : i64, scratch_operands = 0 : i64, tpu.core_type = #tpu.core_type<tc>, window_params = [{transform_indices = @transform_0, window_bounds = array<i64: 8, 1024>}, {pipeline_mode = #tpu.pipeline_mode<synchronous>, transform_indices = @transform_1, window_bounds = array<i64: 1024, 512>}, {pipeline_mode = #tpu.pipeline_mode<synchronous>, transform_indices = @transform_2, window_bounds = array<i64: 1, 512>}, {pipeline_mode = #tpu.pipeline_mode<synchronous>, transform_indices = @transform_3, window_bounds = array<i64: 512, 256>}, {pipeline_mode = #tpu.pipeline_mode<synchronous>, transform_indices = @transform_4, window_bounds = array<i64: 1, 256>}, {pipeline_mode = #tpu.pipeline_mode<synchronous>, transform_indices = @transform_5, window_bounds = array<i64: 256, 128>}, {pipeline_mode = #tpu.pipeline_mode<synchronous>, transform_indices = @transform_6, window_bounds = array<i64: 1, 128>}, {pipeline_mode = #tpu.pipeline_mode<synchronous>, transform_indices = @transform_7, window_bounds = array<i64: 128, 128>}, {pipeline_mode = #tpu.pipeline_mode<synchronous>, transform_indices = @transform_8, window_bounds = array<i64: 1, 128>}, {transform_indices = @transform_9, window_bounds = array<i64: 8, 128>}]} {
    %c0 = arith.constant 0 : index
    %c0_0 = arith.constant 0 : index
    %0 = vector.load %arg1[%c0, %c0_0] : memref<8x1024xf32, #tpu.memory_space<vmem>>, vector<8x1024xf32>
    %c0_1 = arith.constant 0 : index
    %c0_2 = arith.constant 0 : index
    %1 = vector.load %arg2[%c0_1, %c0_2] : memref<1024x512xf32, #tpu.memory_space<vmem>>, vector<1024x512xf32>
    %cst = arith.constant dense<0.000000e+00> : vector<8x512xf32>
    %2 = tpu.matmul %0, %1, %cst {dimension_numbers = #tpu.dot_dimension_numbers<[1], [0], [0], [1], [0, 0, 1, 1], [], []>} : vector<8x1024xf32>, vector<1024x512xf32>, vector<8x512xf32> -> vector<8x512xf32>
    %c0_3 = arith.constant 0 : index
    %c0_4 = arith.constant 0 : index
    %3 = vector.load %arg3[%c0_3, %c0_4] : memref<1x512xf32, #tpu.memory_space<vmem>>, vector<1x512xf32>
    %4 = vector.broadcast %3 : vector<1x512xf32> to vector<8x512xf32>
    %5 = arith.addf %2, %4 : vector<8x512xf32>
    %cst_5 = arith.constant 0.000000e+00 : f32
    %6 = vector.broadcast %cst_5 : f32 to vector<8x512xf32>
    %7 = arith.maximumf %5, %6 : vector<8x512xf32>
    %c0_6 = arith.constant 0 : index
    %c0_7 = arith.constant 0 : index
    %8 = vector.load %arg4[%c0_6, %c0_7] : memref<512x256xf32, #tpu.memory_space<vmem>>, vector<512x256xf32>
    %cst_8 = arith.constant dense<0.000000e+00> : vector<8x256xf32>
    %9 = tpu.matmul %7, %8, %cst_8 {dimension_numbers = #tpu.dot_dimension_numbers<[1], [0], [0], [1], [0, 0, 1, 1], [], []>} : vector<8x512xf32>, vector<512x256xf32>, vector<8x256xf32> -> vector<8x256xf32>
    %c0_9 = arith.constant 0 : index
    %c0_10 = arith.constant 0 : index
    %10 = vector.load %arg5[%c0_9, %c0_10] : memref<1x256xf32, #tpu.memory_space<vmem>>, vector<1x256xf32>
    %11 = vector.broadcast %10 : vector<1x256xf32> to vector<8x256xf32>
    %12 = arith.addf %9, %11 : vector<8x256xf32>
    %cst_11 = arith.constant 0.000000e+00 : f32
    %13 = vector.broadcast %cst_11 : f32 to vector<8x256xf32>
    %14 = arith.maximumf %12, %13 : vector<8x256xf32>
    %c0_12 = arith.constant 0 : index
    %c0_13 = arith.constant 0 : index
    %15 = vector.load %arg6[%c0_12, %c0_13] : memref<256x128xf32, #tpu.memory_space<vmem>>, vector<256x128xf32>
    %cst_14 = arith.constant dense<0.000000e+00> : vector<8x128xf32>
    %16 = tpu.matmul %14, %15, %cst_14 {dimension_numbers = #tpu.dot_dimension_numbers<[1], [0], [0], [1], [0, 0, 1, 1], [], []>} : vector<8x256xf32>, vector<256x128xf32>, vector<8x128xf32> -> vector<8x128xf32>
    %c0_15 = arith.constant 0 : index
    %c0_16 = arith.constant 0 : index
    %17 = vector.load %arg7[%c0_15, %c0_16] : memref<1x128xf32, #tpu.memory_space<vmem>>, vector<1x128xf32>
    %18 = vector.broadcast %17 : vector<1x128xf32> to vector<8x128xf32>
    %19 = arith.addf %16, %18 : vector<8x128xf32>
    %cst_17 = arith.constant 0.000000e+00 : f32
    %20 = vector.broadcast %cst_17 : f32 to vector<8x128xf32>
    %21 = arith.maximumf %19, %20 : vector<8x128xf32>
    %c0_18 = arith.constant 0 : index
    %c0_19 = arith.constant 0 : index
    %22 = vector.load %arg8[%c0_18, %c0_19] : memref<128x128xf32, #tpu.memory_space<vmem>>, vector<128x128xf32>
    %cst_20 = arith.constant dense<0.000000e+00> : vector<8x128xf32>
    %23 = tpu.matmul %21, %22, %cst_20 {dimension_numbers = #tpu.dot_dimension_numbers<[1], [0], [0], [1], [0, 0, 1, 1], [], []>} : vector<8x128xf32>, vector<128x128xf32>, vector<8x128xf32> -> vector<8x128xf32>
    %c0_21 = arith.constant 0 : index
    %c0_22 = arith.constant 0 : index
    %24 = vector.load %arg9[%c0_21, %c0_22] : memref<1x128xf32, #tpu.memory_space<vmem>>, vector<1x128xf32>
    %25 = vector.broadcast %24 : vector<1x128xf32> to vector<8x128xf32>
    %26 = arith.addf %23, %25 : vector<8x128xf32>
    %cst_23 = arith.constant 0.000000e+00 : f32
    %27 = vector.broadcast %cst_23 : f32 to vector<8x128xf32>
    %28 = arith.maximumf %26, %27 : vector<8x128xf32>
    %c0_24 = arith.constant 0 : index
    %c0_25 = arith.constant 0 : index
    %29 = vector.load %arg10[%c0_24, %c0_25] : memref<8x128xf32, #tpu.memory_space<vmem>>, vector<8x128xf32>
    tpu.vector_store %arg10[%c0_24, %c0_25], %28 {strides = array<i32>} : memref<8x128xf32, #tpu.memory_space<vmem>>, vector<8x128xf32>,
    return
  }
  func.func @transform_0(%arg0: i32) -> (i32, i32) {
    %c0_i32 = arith.constant 0 : i32
    %c0_i32_0 = arith.constant 0 : i32
    return %arg0, %c0_i32 : i32, i32
  }
  func.func @transform_1(%arg0: i32) -> (i32, i32) {
    %c0_i32 = arith.constant 0 : i32
    %c0_i32_0 = arith.constant 0 : i32
    %c0_i32_1 = arith.constant 0 : i32
    return %c0_i32, %c0_i32_0 : i32, i32
  }
  func.func @transform_2(%arg0: i32) -> (i32, i32) {
    %c0_i32 = arith.constant 0 : i32
    %c0_i32_0 = arith.constant 0 : i32
    %c0_i32_1 = arith.constant 0 : i32
    return %c0_i32, %c0_i32_0 : i32, i32
  }
  func.func @transform_3(%arg0: i32) -> (i32, i32) {
    %c0_i32 = arith.constant 0 : i32
    %c0_i32_0 = arith.constant 0 : i32
    %c0_i32_1 = arith.constant 0 : i32
    return %c0_i32, %c0_i32_0 : i32, i32
  }
  func.func @transform_4(%arg0: i32) -> (i32, i32) {
    %c0_i32 = arith.constant 0 : i32
    %c0_i32_0 = arith.constant 0 : i32
    %c0_i32_1 = arith.constant 0 : i32
    return %c0_i32, %c0_i32_0 : i32, i32
  }
  func.func @transform_5(%arg0: i32) -> (i32, i32) {
    %c0_i32 = arith.constant 0 : i32
    %c0_i32_0 = arith.constant 0 : i32
    %c0_i32_1 = arith.constant 0 : i32
    return %c0_i32, %c0_i32_0 : i32, i32
  }
  func.func @transform_6(%arg0: i32) -> (i32, i32) {
    %c0_i32 = arith.constant 0 : i32
    %c0_i32_0 = arith.constant 0 : i32
    %c0_i32_1 = arith.constant 0 : i32
    return %c0_i32, %c0_i32_0 : i32, i32
  }
  func.func @transform_7(%arg0: i32) -> (i32, i32) {
    %c0_i32 = arith.constant 0 : i32
    %c0_i32_0 = arith.constant 0 : i32
    %c0_i32_1 = arith.constant 0 : i32
    return %c0_i32, %c0_i32_0 : i32, i32
  }
  func.func @transform_8(%arg0: i32) -> (i32, i32) {
    %c0_i32 = arith.constant 0 : i32
    %c0_i32_0 = arith.constant 0 : i32
    %c0_i32_1 = arith.constant 0 : i32
    return %c0_i32, %c0_i32_0 : i32, i32
  }
  func.func @transform_9(%arg0: i32) -> (i32, i32) {
    %c0_i32 = arith.constant 0 : i32
    %c0_i32_0 = arith.constant 0 : i32
    return %arg0, %c0_i32 : i32, i32
  }
}

</mosaic_0001>

<llo_original>
// kernel: conv_mlp_trunk_forward.1
$region0: #{conv_mlp_trunk_forward.1}
  #allocation0 [shape = 'u32[]', space=smem, size = 0x4, offset = 0x4, fixed_abs, tag = 'smem constant byte address 0x4 - core index']
  #allocation1 [shape = 'u32[144,128]{1,0:T(1,128)}', space=vmem, size = 0x12000, scoped, tag = 'internal scratch']
  %s0 = inlined_call_operand.vmem [shape: f32[8,1024], index: 0, kind: input, shape index: {}]
  %s1 = inlined_call_operand.hbm [shape: f32[1024,512], index: 1, kind: input, shape index: {}]
  %s2 = inlined_call_operand.hbm [shape: f32[1,512], index: 2, kind: input, shape index: {}]
  %s3 = inlined_call_operand.hbm [shape: f32[512,256], index: 3, kind: input, shape index: {}]
  %s4 = inlined_call_operand.hbm [shape: f32[1,256], index: 4, kind: input, shape index: {}]
  %s5 = inlined_call_operand.hbm [shape: f32[256,128], index: 5, kind: input, shape index: {}]
  %s6 = inlined_call_operand.hbm [shape: f32[1,128], index: 6, kind: input, shape index: {}]
  %s7 = inlined_call_operand.hbm [shape: f32[128,128], index: 7, kind: input, shape index: {}]
  %s8 = inlined_call_operand.hbm [shape: f32[1,128], index: 8, kind: input, shape index: {}]
  %s9 = inlined_call_operand.vmem [shape: f32[8,128], index: 9, kind: output, shape index: {}]
  %s10 = sld [smem:[#allocation0]]
  $region78: #{conv_mlp_trunk_forward.1} parent=0
    _
  %s12 = ssub.s32 1, %s10
  %s13 = scalar_select 0, %s12, %s10
  $region1: #{conv_mlp_trunk_forward.1} parent=0
    #allocation2 [shape = 'u8[2097152]{0}', space=vmem, size = 0x200000, scoped, tag = 'input window, operand 1, single buffered']
    #allocation3 [shape = 's32[1]{0}', space=sflag, size = 0x4, scoped, tag = 'scoped memory for conv_mlp_trunk_forward.1']
    #allocation4 [shape = 'u8[2048]{0}', space=vmem, size = 0x800, scoped, tag = 'input window, operand 2, single buffered']
    #allocation5 [shape = 's32[1]{0}', space=sflag, size = 0x4, scoped, tag = 'scoped memory for conv_mlp_trunk_forward.1']
    #allocation6 [shape = 'u8[524288]{0}', space=vmem, size = 0x80000, scoped, tag = 'input window, operand 3, single buffered']
    #allocation7 [shape = 'u8[1024]{0}', space=vmem, size = 0x400, scoped, tag = 'input window, operand 4, single buffered']
    #allocation8 [shape = 's32[1]{0}', space=sflag, size = 0x4, scoped, tag = 'scoped memory for conv_mlp_trunk_forward.1']
    #allocation9 [shape = 'u8[131072]{0}', space=vmem, size = 0x20000, scoped, tag = 'input window, operand 5, single buffered']
    #allocation10 [shape = 'u8[512]{0}', space=vmem, size = 0x400, scoped, tag = 'input window, operand 6, single buffered']
    #allocation11 [shape = 's32[1]{0}', space=sflag, size = 0x4, scoped, tag = 'scoped memory for conv_mlp_trunk_forward.1']
    #allocation12 [shape = 'u8[65536]{0}', space=vmem, size = 0x10000, scoped, tag = 'input window, operand 7, single buffered']
    #allocation13 [shape = 'u8[512]{0}', space=vmem, size = 0x400, scoped, tag = 'input window, operand 8, single buffered']
    #allocation14 [shape = 's32[1]{0}', space=sflag, size = 0x4, scoped, tag = 'scoped memory for conv_mlp_trunk_forward.1']
    %14 = vsyncpa [#allocation3], 0
    %15 = vsyncpa [#allocation5], 0
    %16 = vsyncpa [#allocation8], 0
    %17 = vsyncpa [#allocation11], 0
    %18 = vsyncpa [#allocation14], 0
    // Predicated region
    $region2: #{conv_mlp_trunk_forward.1} parent=1 // pred_check
      _
    $region3: #{conv_mlp_trunk_forward.1} parent=1 // pred_check_branch
      %20 = sbr.rel (0) target = $region5
    $region4: #{conv_mlp_trunk_forward.1} parent=1 // pred_region
      _
    $region5: #{conv_mlp_trunk_forward.1} parent=1 // pred_fallthru
      _
    // Predicated region
    $region6: #{conv_mlp_trunk_forward.1} parent=1 // pred_check
      _
    $region7: #{conv_mlp_trunk_forward.1} parent=1 // pred_check_branch
      %22 = sbr.rel (0) target = $region9
    $region8: #{conv_mlp_trunk_forward.1} parent=1 // pred_region
      %s24 = ssub.s32 65536, 65536
      %25 = vsyncadd [#allocation3], %s24
      %s26 = sshll.u32 [#allocation2], 4
      %s27 = int_to_ptr.vmem [resolvable:$true] %s26
      %32 = dma.hbm_to_vmem [thread:$0]  %s1, 65536, %s27, [#allocation3], 512, 512, 32
    $region9: #{conv_mlp_trunk_forward.1} parent=1 // pred_fallthru
      _
    // Predicated region
    $region10: #{conv_mlp_trunk_forward.1} parent=1 // pred_check
      _
    $region11: #{conv_mlp_trunk_forward.1} parent=1 // pred_check_branch
      %34 = sbr.rel (0) target = $region13
    $region12: #{conv_mlp_trunk_forward.1} parent=1 // pred_region
      %s36 = ssub.s32 64, 64
      %37 = vsyncadd [#allocation5], %s36
      %s39 = sshll.u32 [#allocation4], 4
      %s40 = int_to_ptr.vmem [resolvable:$true] %s39
      %42 = dma.hbm_to_vmem [thread:$0]  %s2, 64, %s40, [#allocation5]
    $region13: #{conv_mlp_trunk_forward.1} parent=1 // pred_fallthru
      _
    // Predicated region
    $region14: #{conv_mlp_trunk_forward.1} parent=1 // pred_check
      _
    $region15: #{conv_mlp_trunk_forward.1} parent=1 // pred_check_branch
      %44 = sbr.rel (0) target = $region17
    $region16: #{conv_mlp_trunk_forward.1} parent=1 // pred_region
      %s46 = ssub.s32 16384, 16384
      %47 = vsyncadd [#allocation5], %s46
      %s48 = sshll.u32 [#allocation6], 4
      %s49 = int_to_ptr.vmem [resolvable:$true] %s48
      %54 = dma.hbm_to_vmem [thread:$0]  %s3, 16384, %s49, [#allocation5], 256, 256, 16
    $region17: #{conv_mlp_trunk_forward.1} parent=1 // pred_fallthru
      _
    // Predicated region
    $region18: #{conv_mlp_trunk_forward.1} parent=1 // pred_check
      _
    $region19: #{conv_mlp_trunk_forward.1} parent=1 // pred_check_branch
      %56 = sbr.rel (0) target = $region21
    $region20: #{conv_mlp_trunk_forward.1} parent=1 // pred_region
      %s58 = ssub.s32 32, 32
      %59 = vsyncadd [#allocation8], %s58
      %s61 = sshll.u32 [#allocation7], 4
      %s62 = int_to_ptr.vmem [resolvable:$true] %s61
      %64 = dma.hbm_to_vmem [thread:$0]  %s4, 32, %s62, [#allocation8]
    $region21: #{conv_mlp_trunk_forward.1} parent=1 // pred_fallthru
      _
    // Predicated region
    $region22: #{conv_mlp_trunk_forward.1} parent=1 // pred_check
      _
    $region23: #{conv_mlp_trunk_forward.1} parent=1 // pred_check_branch
      %66 = sbr.rel (0) target = $region25
    $region24: #{conv_mlp_trunk_forward.1} parent=1 // pred_region
      %s68 = ssub.s32 4096, 4096
      %69 = vsyncadd [#allocation8], %s68
      %s70 = sshll.u32 [#allocation9], 4
      %s71 = int_to_ptr.vmem [resolvable:$true] %s70
      %76 = dma.hbm_to_vmem [thread:$0]  %s5, 4096, %s71, [#allocation8], 128, 128, 8
    $region25: #{conv_mlp_trunk_forward.1} parent=1 // pred_fallthru
      _
    // Predicated region
    $region26: #{conv_mlp_trunk_forward.1} parent=1 // pred_check
      _
    $region27: #{conv_mlp_trunk_forward.1} parent=1 // pred_check_branch
      %78 = sbr.rel (0) target = $region29
    $region28: #{conv_mlp_trunk_forward.1} parent=1 // pred_region
      %s80 = ssub.s32 16, 16
      %81 = vsyncadd [#allocation11], %s80
      %s83 = sshll.u32 [#allocation10], 4
      %s84 = int_to_ptr.vmem [resolvable:$true] %s83
      %86 = dma.hbm_to_vmem [thread:$0]  %s6, 16, %s84, [#allocation11]
    $region29: #{conv_mlp_trunk_forward.1} parent=1 // pred_fallthru
      _
    // Predicated region
    $region30: #{conv_mlp_trunk_forward.1} parent=1 // pred_check
      _
    $region31: #{conv_mlp_trunk_forward.1} parent=1 // pred_check_branch
      %88 = sbr.rel (0) target = $region33
    $region32: #{conv_mlp_trunk_forward.1} parent=1 // pred_region
      %s90 = ssub.s32 2048, 2048
      %91 = vsyncadd [#allocation11], %s90
      %s92 = sshll.u32 [#allocation12], 4
      %s93 = int_to_ptr.vmem [resolvable:$true] %s92
      %98 = dma.hbm_to_vmem [thread:$0]  %s7, 2048, %s93, [#allocation11], 128, 128, 8
    $region33: #{conv_mlp_trunk_forward.1} parent=1 // pred_fallthru
      _
    // Predicated region
    $region34: #{conv_mlp_trunk_forward.1} parent=1 // pred_check
      _
    $region35: #{conv_mlp_trunk_forward.1} parent=1 // pred_check_branch
      %100 = sbr.rel (0) target = $region37
    $region36: #{conv_mlp_trunk_forward.1} parent=1 // pred_region
      %s102 = ssub.s32 16, 16
      %103 = vsyncadd [#allocation14], %s102
      %s105 = sshll.u32 [#allocation13], 4
      %s106 = int_to_ptr.vmem [resolvable:$true] %s105
      %108 = dma.hbm_to_vmem [thread:$0]  %s8, 16, %s106, [#allocation14]
    $region37: #{conv_mlp_trunk_forward.1} parent=1 // pred_fallthru
      _
    // Predicated region
    $region38: #{conv_mlp_trunk_forward.1} parent=1 // pred_check
      _
    $region39: #{conv_mlp_trunk_forward.1} parent=1 // pred_check_branch
      %110 = sbr.rel (0) target = $region41
    $region40: #{conv_mlp_trunk_forward.1} parent=1 // pred_region
      %111 = dma.done [#allocation3], 65536
    $region41: #{conv_mlp_trunk_forward.1} parent=1 // pred_fallthru
      _
    // Predicated region
    $region42: #{conv_mlp_trunk_forward.1} parent=1 // pred_check
      _
    $region43: #{conv_mlp_trunk_forward.1} parent=1 // pred_check_branch
      %113 = sbr.rel (0) target = $region45
    $region44: #{conv_mlp_trunk_forward.1} parent=1 // pred_region
      %114 = dma.done [#allocation5], 64
    $region45: #{conv_mlp_trunk_forward.1} parent=1 // pred_fallthru
      _
    // Predicated region
    $region46: #{conv_mlp_trunk_forward.1} parent=1 // pred_check
      _
    $region47: #{conv_mlp_trunk_forward.1} parent=1 // pred_check_branch
      %116 = sbr.rel (0) target = $region49
    $region48: #{conv_mlp_trunk_forward.1} parent=1 // pred_region
      %117 = dma.done [#allocation5], 16384
    $region49: #{conv_mlp_trunk_forward.1} parent=1 // pred_fallthru
      _
    // Predicated region
    $region50: #{conv_mlp_trunk_forward.1} parent=1 // pred_check
      _
    $region51: #{conv_mlp_trunk_forward.1} parent=1 // pred_check_branch
      %119 = sbr.rel (0) target = $region53
    $region52: #{conv_mlp_trunk_forward.1} parent=1 // pred_region
      %120 = dma.done [#allocation8], 32
    $region53: #{conv_mlp_trunk_forward.1} parent=1 // pred_fallthru
      _
    // Predicated region
    $region54: #{conv_mlp_trunk_forward.1} parent=1 // pred_check
      _
    $region55: #{conv_mlp_trunk_forward.1} parent=1 // pred_check_branch
      %122 = sbr.rel (0) target = $region57
    $region56: #{conv_mlp_trunk_forward.1} parent=1 // pred_region
      %123 = dma.done [#allocation8], 4096
    $region57: #{conv_mlp_trunk_forward.1} parent=1 // pred_fallthru
      _
    // Predicated region
    $region58: #{conv_mlp_trunk_forward.1} parent=1 // pred_check
      _
    $region59: #{conv_mlp_trunk_forward.1} parent=1 // pred_check_branch
      %125 = sbr.rel (0) target = $region61
    $region60: #{conv_mlp_trunk_forward.1} parent=1 // pred_region
      %126 = dma.done [#allocation11], 16
    $region61: #{conv_mlp_trunk_forward.1} parent=1 // pred_fallthru
      _
    // Predicated region
    $region62: #{conv_mlp_trunk_forward.1} parent=1 // pred_check
      _
    $region63: #{conv_mlp_trunk_forward.1} parent=1 // pred_check_branch
      %128 = sbr.rel (0) target = $region65
    $region64: #{conv_mlp_trunk_forward.1} parent=1 // pred_region
      %129 = dma.done [#allocation11], 2048
    $region65: #{conv_mlp_trunk_forward.1} parent=1 // pred_fallthru
      _
    // Predicated region
    $region66: #{conv_mlp_trunk_forward.1} parent=1 // pred_check
      _
    $region67: #{conv_mlp_trunk_forward.1} parent=1 // pred_check_branch
      %131 = sbr.rel (0) target = $region69
    $region68: #{conv_mlp_trunk_forward.1} parent=1 // pred_region
      %132 = dma.done [#allocation14], 16
    $region69: #{conv_mlp_trunk_forward.1} parent=1 // pred_fallthru
      _
    %v133 = vld [vmem:[%s0] sm:$0xff]
    %v134 = vld [vmem:[%s0 + $0x8] sm:$0xff]
    %v135 = vld [vmem:[%s0 + $0x10] sm:$0xff]
    %v136 = vld [vmem:[%s0 + $0x18] sm:$0xff]
    %v137 = vld [vmem:[%s0 + $0x20] sm:$0xff]
    %v138 = vld [vmem:[%s0 + $0x28] sm:$0xff]
    %v139 = vld [vmem:[%s0 + $0x30] sm:$0xff]
    %v140 = vld [vmem:[%s0 + $0x38] sm:$0xff]
    %v141 = vld [vmem:[#allocation2] sm:$0xff]
    %v142 = vld [vmem:[#allocation2 + $0x8] sm:$0xff]
    %v143 = vld [vmem:[#allocation2 + $0x10] sm:$0xff]
    %v144 = vld [vmem:[#allocation2 + $0x18] sm:$0xff]
    %v145 = vld [vmem:[#allocation2 + $0x20] sm:$0xff]
    %v146 = vld [vmem:[#allocation2 + $0x28] sm:$0xff]
    %v147 = vld [vmem:[#allocation2 + $0x30] sm:$0xff]
    %v148 = vld [vmem:[#allocation2 + $0x38] sm:$0xff]
    %v149 = vld [vmem:[#allocation2 + $0x40] sm:$0xff]
    %v150 = vld [vmem:[#allocation2 + $0x48] sm:$0xff]
    %v151 = vld [vmem:[#allocation2 + $0x50] sm:$0xff]
    %v152 = vld [vmem:[#allocation2 + $0x58] sm:$0xff]
    %v153 = vld [vmem:[#allocation2 + $0x60] sm:$0xff]
    %v154 = vld [vmem:[#allocation2 + $0x68] sm:$0xff]
    %v155 = vld [vmem:[#allocation2 + $0x70] sm:$0xff]
    %v156 = vld [vmem:[#allocation2 + $0x78] sm:$0xff]
    %v157 = vld [vmem:[#allocation2 + $0x80] sm:$0xff]
    %v158 = vld [vmem:[#allocation2 + $0x88] sm:$0xff]
    %v159 = vld [vmem:[#allocation2 + $0x90] sm:$0xff]
    %v160 = vld [vmem:[#allocation2 + $0x98] sm:$0xff]
    %v161 = vld [vmem:[#allocation2 + $0xa0] sm:$0xff]
    %v162 = vld [vmem:[#allocation2 + $0xa8] sm:$0xff]
    %v163 = vld [vmem:[#allocation2 + $0xb0] sm:$0xff]
    %v164 = vld [vmem:[#allocation2 + $0xb8] sm:$0xff]
    %v165 = vld [vmem:[#allocation2 + $0xc0] sm:$0xff]
    %v166 = vld [vmem:[#allocation2 + $0xc8] sm:$0xff]
    %v167 = vld [vmem:[#allocation2 + $0xd0] sm:$0xff]
    %v168 = vld [vmem:[#allocation2 + $0xd8] sm:$0xff]
    %v169 = vld [vmem:[#allocation2 + $0xe0] sm:$0xff]
    %v170 = vld [vmem:[#allocation2 + $0xe8] sm:$0xff]
    %v171 = vld [vmem:[#allocation2 + $0xf0] sm:$0xff]
    %v172 = vld [vmem:[#allocation2 + $0xf8] sm:$0xff]
    %v173 = vld [vmem:[#allocation2 + $0x100] sm:$0xff]
    %v174 = vld [vmem:[#allocation2 + $0x108] sm:$0xff]
    %v175 = vld [vmem:[#allocation2 + $0x110] sm:$0xff]
    %v176 = vld [vmem:[#allocation2 + $0x118] sm:$0xff]
    %v177 = vld [vmem:[#allocation2 + $0x120] sm:$0xff]
    %v178 = vld [vmem:[#allocation2 + $0x128] sm:$0xff]
    %v179 = vld [vmem:[#allocation2 + $0x130] sm:$0xff]
    %v180 = vld [vmem:[#allocation2 + $0x138] sm:$0xff]
    %v181 = vld [vmem:[#allocation2 + $0x140] sm:$0xff]
    %v182 = vld [vmem:[#allocation2 + $0x148] sm:$0xff]
    %v183 = vld [vmem:[#allocation2 + $0x150] sm:$0xff]
    %v184 = vld [vmem:[#allocation2 + $0x158] sm:$0xff]
    %v185 = vld [vmem:[#allocation2 + $0x160] sm:$0xff]
    %v186 = vld [vmem:[#allocation2 + $0x168] sm:$0xff]
    %v187 = vld [vmem:[#allocation2 + $0x170] sm:$0xff]
    %v188 = vld [vmem:[#allocation2 + $0x178] sm:$0xff]
    %v189 = vld [vmem:[#allocation2 + $0x180] sm:$0xff]
    %v190 = vld [vmem:[#allocation2 + $0x188] sm:$0xff]
    %v191 = vld [vmem:[#allocation2 + $0x190] sm:$0xff]
    %v192 = vld [vmem:[#allocation2 + $0x198] sm:$0xff]
    %v193 = vld [vmem:[#allocation2 + $0x1a0] sm:$0xff]
    %v194 = vld [vmem:[#allocation2 + $0x1a8] sm:$0xff]
    %v195 = vld [vmem:[#allocation2 + $0x1b0] sm:$0xff]
    %v196 = vld [vmem:[#allocation2 + $0x1b8] sm:$0xff]
    %v197 = vld [vmem:[#allocation2 + $0x1c0] sm:$0xff]
    %v198 = vld [vmem:[#allocation2 + $0x1c8] sm:$0xff]
    %v199 = vld [vmem:[#allocation2 + $0x1d0] sm:$0xff]
    %v200 = vld [vmem:[#allocation2 + $0x1d8] sm:$0xff]
    %v201 = vld [vmem:[#allocation2 + $0x1e0] sm:$0xff]
    %v202 = vld [vmem:[#allocation2 + $0x1e8] sm:$0xff]
    %v203 = vld [vmem:[#allocation2 + $0x1f0] sm:$0xff]
    %v204 = vld [vmem:[#allocation2 + $0x1f8] sm:$0xff]
    %v205 = vld [vmem:[#allocation2 + $0x200] sm:$0xff]
    %v206 = vld [vmem:[#allocation2 + $0x208] sm:$0xff]
    %v207 = vld [vmem:[#allocation2 + $0x210] sm:$0xff]
    %v208 = vld [vmem:[#allocation2 + $0x218] sm:$0xff]
    %v209 = vld [vmem:[#allocation2 + $0x220] sm:$0xff]
    %v210 = vld [vmem:[#allocation2 + $0x228] sm:$0xff]
    %v211 = vld [vmem:[#allocation2 + $0x230] sm:$0xff]
    %v212 = vld [vmem:[#allocation2 + $0x238] sm:$0xff]
    %v213 = vld [vmem:[#allocation2 + $0x240] sm:$0xff]
    %v214 = vld [vmem:[#allocation2 + $0x248] sm:$0xff]
    %v215 = vld [vmem:[#allocation2 + $0x250] sm:$0xff]
    %v216 = vld [vmem:[#allocation2 + $0x258] sm:$0xff]
    %v217 = vld [vmem:[#allocation2 + $0x260] sm:$0xff]
    %v218 = vld [vmem:[#allocation2 + $0x268] sm:$0xff]
    %v219 = vld [vmem:[#allocation2 + $0x270] sm:$0xff]
    %v220 = vld [vmem:[#allocation2 + $0x278] sm:$0xff]
    %v221 = vld [vmem:[#allocation2 + $0x280] sm:$0xff]
    %v222 = vld [vmem:[#allocation2 + $0x288] sm:$0xff]
    %v223 = vld [vmem:[#allocation2 + $0x290] sm:$0xff]
    %v224 = vld [vmem:[#allocation2 + $0x298] sm:$0xff]
    %v225 = vld [vmem:[#allocation2 + $0x2a0] sm:$0xff]
    %v226 = vld [vmem:[#allocation2 + $0x2a8] sm:$0xff]
    %v227 = vld [vmem:[#allocation2 + $0x2b0] sm:$0xff]
    %v228 = vld [vmem:[#allocation2 + $0x2b8] sm:$0xff]
    %v229 = vld [vmem:[#allocation2 + $0x2c0] sm:$0xff]
    %v230 = vld [vmem:[#allocation2 + $0x2c8] sm:$0xff]
    %v231 = vld [vmem:[#allocation2 + $0x2d0] sm:$0xff]
    %v232 = vld [vmem:[#allocation2 + $0x2d8] sm:$0xff]
    %v233 = vld [vmem:[#allocation2 + $0x2e0] sm:$0xff]
    %v234 = vld [vmem:[#allocation2 + $0x2e8] sm:$0xff]
    %v235 = vld [vmem:[#allocation2 + $0x2f0] sm:$0xff]
    %v236 = vld [vmem:[#allocation2 + $0x2f8] sm:$0xff]
    %v237 = vld [vmem:[#allocation2 + $0x300] sm:$0xff]
    %v238 = vld [vmem:[#allocation2 + $0x308] sm:$0xff]
    %v239 = vld [vmem:[#allocation2 + $0x310] sm:$0xff]
    %v240 = vld [vmem:[#allocation2 + $0x318] sm:$0xff]
    %v241 = vld [vmem:[#allocation2 + $0x320] sm:$0xff]
    %v242 = vld [vmem:[#allocation2 + $0x328] sm:$0xff]
    %v243 = vld [vmem:[#allocation2 + $0x330] sm:$0xff]
    %v244 = vld [vmem:[#allocation2 + $0x338] sm:$0xff]
    %v245 = vld [vmem:[#allocation2 + $0x340] sm:$0xff]
    %v246 = vld [vmem:[#allocation2 + $0x348] sm:$0xff]
    %v247 = vld [vmem:[#allocation2 + $0x350] sm:$0xff]
    %v248 = vld [vmem:[#allocation2 + $0x358] sm:$0xff]
    %v249 = vld [vmem:[#allocation2 + $0x360] sm:$0xff]
    %v250 = vld [vmem:[#allocation2 + $0x368] sm:$0xff]
    %v251 = vld [vmem:[#allocation2 + $0x370] sm:$0xff]
    %v252 = vld [vmem:[#allocation2 + $0x378] sm:$0xff]
    %v253 = vld [vmem:[#allocation2 + $0x380] sm:$0xff]
    %v254 = vld [vmem:[#allocation2 + $0x388] sm:$0xff]
    %v255 = vld [vmem:[#allocation2 + $0x390] sm:$0xff]
    %v256 = vld [vmem:[#allocation2 + $0x398] sm:$0xff]
    %v257 = vld [vmem:[#allocation2 + $0x3a0] sm:$0xff]
    %v258 = vld [vmem:[#allocation2 + $0x3a8] sm:$0xff]
    %v259 = vld [vmem:[#allocation2 + $0x3b0] sm:$0xff]
    %v260 = vld [vmem:[#allocation2 + $0x3b8] sm:$0xff]
    %v261 = vld [vmem:[#allocation2 + $0x3c0] sm:$0xff]
    %v262 = vld [vmem:[#allocation2 + $0x3c8] sm:$0xff]
    %v263 = vld [vmem:[#allocation2 + $0x3d0] sm:$0xff]
    %v264 = vld [vmem:[#allocation2 + $0x3d8] sm:$0xff]
    %v265 = vld [vmem:[#allocation2 + $0x3e0] sm:$0xff]
    %v266 = vld [vmem:[#allocation2 + $0x3e8] sm:$0xff]
    %v267 = vld [vmem:[#allocation2 + $0x3f0] sm:$0xff]
    %v268 = vld [vmem:[#allocation2 + $0x3f8] sm:$0xff]
    %v269 = vld [vmem:[#allocation2 + $0x400] sm:$0xff]
    %v270 = vld [vmem:[#allocation2 + $0x408] sm:$0xff]
    %v271 = vld [vmem:[#allocation2 + $0x410] sm:$0xff]
    %v272 = vld [vmem:[#allocation2 + $0x418] sm:$0xff]
    %v273 = vld [vmem:[#allocation2 + $0x420] sm:$0xff]
    %v274 = vld [vmem:[#allocation2 + $0x428] sm:$0xff]
    %v275 = vld [vmem:[#allocation2 + $0x430] sm:$0xff]
    %v276 = vld [vmem:[#allocation2 + $0x438] sm:$0xff]
    %v277 = vld [vmem:[#allocation2 + $0x440] sm:$0xff]
    %v278 = vld [vmem:[#allocation2 + $0x448] sm:$0xff]
    %v279 = vld [vmem:[#allocation2 + $0x450] sm:$0xff]
    %v280 = vld [vmem:[#allocation2 + $0x458] sm:$0xff]
    %v281 = vld [vmem:[#allocation2 + $0x460] sm:$0xff]
    %v282 = vld [vmem:[#allocation2 + $0x468] sm:$0xff]
    %v283 = vld [vmem:[#allocation2 + $0x470] sm:$0xff]
    %v284 = vld [vmem:[#allocation2 + $0x478] sm:$0xff]
    %v285 = vld [vmem:[#allocation2 + $0x480] sm:$0xff]
    %v286 = vld [vmem:[#allocation2 + $0x488] sm:$0xff]
    %v287 = vld [vmem:[#allocation2 + $0x490] sm:$0xff]
    %v288 = vld [vmem:[#allocation2 + $0x498] sm:$0xff]
    %v289 = vld [vmem:[#allocation2 + $0x4a0] sm:$0xff]
    %v290 = vld [vmem:[#allocation2 + $0x4a8] sm:$0xff]
    %v291 = vld [vmem:[#allocation2 + $0x4b0] sm:$0xff]
    %v292 = vld [vmem:[#allocation2 + $0x4b8] sm:$0xff]
    %v293 = vld [vmem:[#allocation2 + $0x4c0] sm:$0xff]
    %v294 = vld [vmem:[#allocation2 + $0x4c8] sm:$0xff]
    %v295 = vld [vmem:[#allocation2 + $0x4d0] sm:$0xff]
    %v296 = vld [vmem:[#allocation2 + $0x4d8] sm:$0xff]
    %v297 = vld [vmem:[#allocation2 + $0x4e0] sm:$0xff]
    %v298 = vld [vmem:[#allocation2 + $0x4e8] sm:$0xff]
    %v299 = vld [vmem:[#allocation2 + $0x4f0] sm:$0xff]
    %v300 = vld [vmem:[#allocation2 + $0x4f8] sm:$0xff]
    %v301 = vld [vmem:[#allocation2 + $0x500] sm:$0xff]
    %v302 = vld [vmem:[#allocation2 + $0x508] sm:$0xff]
    %v303 = vld [vmem:[#allocation2 + $0x510] sm:$0xff]
    %v304 = vld [vmem:[#allocation2 + $0x518] sm:$0xff]
    %v305 = vld [vmem:[#allocation2 + $0x520] sm:$0xff]
    %v306 = vld [vmem:[#allocation2 + $0x528] sm:$0xff]
    %v307 = vld [vmem:[#allocation2 + $0x530] sm:$0xff]
    %v308 = vld [vmem:[#allocation2 + $0x538] sm:$0xff]
    %v309 = vld [vmem:[#allocation2 + $0x540] sm:$0xff]
    %v310 = vld [vmem:[#allocation2 + $0x548] sm:$0xff]
    %v311 = vld [vmem:[#allocation2 + $0x550] sm:$0xff]
    %v312 = vld [vmem:[#allocation2 + $0x558] sm:$0xff]
    %v313 = vld [vmem:[#allocation2 + $0x560] sm:$0xff]
    %v314 = vld [vmem:[#allocation2 + $0x568] sm:$0xff]
    %v315 = vld [vmem:[#allocation2 + $0x570] sm:$0xff]
    %v316 = vld [vmem:[#allocation2 + $0x578] sm:$0xff]
    %v317 = vld [vmem:[#allocation2 + $0x580] sm:$0xff]
    %v318 = vld [vmem:[#allocation2 + $0x588] sm:$0xff]
    %v319 = vld [vmem:[#allocation2 + $0x590] sm:$0xff]
    %v320 = vld [vmem:[#allocation2 + $0x598] sm:$0xff]
    %v321 = vld [vmem:[#allocation2 + $0x5a0] sm:$0xff]
    %v322 = vld [vmem:[#allocation2 + $0x5a8] sm:$0xff]
    %v323 = vld [vmem:[#allocation2 + $0x5b0] sm:$0xff]
    %v324 = vld [vmem:[#allocation2 + $0x5b8] sm:$0xff]
    %v325 = vld [vmem:[#allocation2 + $0x5c0] sm:$0xff]
    %v326 = vld [vmem:[#allocation2 + $0x5c8] sm:$0xff]
    %v327 = vld [vmem:[#allocation2 + $0x5d0] sm:$0xff]
    %v328 = vld [vmem:[#allocation2 + $0x5d8] sm:$0xff]
    %v329 = vld [vmem:[#allocation2 + $0x5e0] sm:$0xff]
    %v330 = vld [vmem:[#allocation2 + $0x5e8] sm:$0xff]
    %v331 = vld [vmem:[#allocation2 + $0x5f0] sm:$0xff]
    %v332 = vld [vmem:[#allocation2 + $0x5f8] sm:$0xff]
    %v333 = vld [vmem:[#allocation2 + $0x600] sm:$0xff]
    %v334 = vld [vmem:[#allocation2 + $0x608] sm:$0xff]
    %v335 = vld [vmem:[#allocation2 + $0x610] sm:$0xff]
    %v336 = vld [vmem:[#allocation2 + $0x618] sm:$0xff]
    %v337 = vld [vmem:[#allocation2 + $0x620] sm:$0xff]
    %v338 = vld [vmem:[#allocation2 + $0x628] sm:$0xff]
    %v339 = vld [vmem:[#allocation2 + $0x630] sm:$0xff]
    %v340 = vld [vmem:[#allocation2 + $0x638] sm:$0xff]
    %v341 = vld [vmem:[#allocation2 + $0x640] sm:$0xff]
    %v342 = vld [vmem:[#allocation2 + $0x648] sm:$0xff]
    %v343 = vld [vmem:[#allocation2 + $0x650] sm:$0xff]
    %v344 = vld [vmem:[#allocation2 + $0x658] sm:$0xff]
    %v345 = vld [vmem:[#allocation2 + $0x660] sm:$0xff]
    %v346 = vld [vmem:[#allocation2 + $0x668] sm:$0xff]
    %v347 = vld [vmem:[#allocation2 + $0x670] sm:$0xff]
    %v348 = vld [vmem:[#allocation2 + $0x678] sm:$0xff]
    %v349 = vld [vmem:[#allocation2 + $0x680] sm:$0xff]
    %v350 = vld [vmem:[#allocation2 + $0x688] sm:$0xff]
    %v351 = vld [vmem:[#allocation2 + $0x690] sm:$0xff]
    %v352 = vld [vmem:[#allocation2 + $0x698] sm:$0xff]
    %v353 = vld [vmem:[#allocation2 + $0x6a0] sm:$0xff]
    %v354 = vld [vmem:[#allocation2 + $0x6a8] sm:$0xff]
    %v355 = vld [vmem:[#allocation2 + $0x6b0] sm:$0xff]
    %v356 = vld [vmem:[#allocation2 + $0x6b8] sm:$0xff]
    %v357 = vld [vmem:[#allocation2 + $0x6c0] sm:$0xff]
    %v358 = vld [vmem:[#allocation2 + $0x6c8] sm:$0xff]
    %v359 = vld [vmem:[#allocation2 + $0x6d0] sm:$0xff]
    %v360 = vld [vmem:[#allocation2 + $0x6d8] sm:$0xff]
    %v361 = vld [vmem:[#allocation2 + $0x6e0] sm:$0xff]
    %v362 = vld [vmem:[#allocation2 + $0x6e8] sm:$0xff]
    %v363 = vld [vmem:[#allocation2 + $0x6f0] sm:$0xff]
    %v364 = vld [vmem:[#allocation2 + $0x6f8] sm:$0xff]
    %v365 = vld [vmem:[#allocation2 + $0x700] sm:$0xff]
    %v366 = vld [vmem:[#allocation2 + $0x708] sm:$0xff]
    %v367 = vld [vmem:[#allocation2 + $0x710] sm:$0xff]
    %v368 = vld [vmem:[#allocation2 + $0x718] sm:$0xff]
    %v369 = vld [vmem:[#allocation2 + $0x720] sm:$0xff]
    %v370 = vld [vmem:[#allocation2 + $0x728] sm:$0xff]
    %v371 = vld [vmem:[#allocation2 + $0x730] sm:$0xff]
    %v372 = vld [vmem:[#allocation2 + $0x738] sm:$0xff]
    %v373 = vld [vmem:[#allocation2 + $0x740] sm:$0xff]
    %v374 = vld [vmem:[#allocation2 + $0x748] sm:$0xff]
    %v375 = vld [vmem:[#allocation2 + $0x750] sm:$0xff]
    %v376 = vld [vmem:[#allocation2 + $0x758] sm:$0xff]
    %v377 = vld [vmem:[#allocation2 + $0x760] sm:$0xff]
    %v378 = vld [vmem:[#allocation2 + $0x768] sm:$0xff]
    %v379 = vld [vmem:[#allocation2 + $0x770] sm:$0xff]
    %v380 = vld [vmem:[#allocation2 + $0x778] sm:$0xff]
    %v381 = vld [vmem:[#allocation2 + $0x780] sm:$0xff]
    %v382 = vld [vmem:[#allocation2 + $0x788] sm:$0xff]
    %v383 = vld [vmem:[#allocation2 + $0x790] sm:$0xff]
    %v384 = vld [vmem:[#allocation2 + $0x798] sm:$0xff]
    %v385 = vld [vmem:[#allocation2 + $0x7a0] sm:$0xff]
    %v386 = vld [vmem:[#allocation2 + $0x7a8] sm:$0xff]
    %v387 = vld [vmem:[#allocation2 + $0x7b0] sm:$0xff]
    %v388 = vld [vmem:[#allocation2 + $0x7b8] sm:$0xff]
    %v389 = vld [vmem:[#allocation2 + $0x7c0] sm:$0xff]
    %v390 = vld [vmem:[#allocation2 + $0x7c8] sm:$0xff]
    %v391 = vld [vmem:[#allocation2 + $0x7d0] sm:$0xff]
    %v392 = vld [vmem:[#allocation2 + $0x7d8] sm:$0xff]
    %v393 = vld [vmem:[#allocation2 + $0x7e0] sm:$0xff]
    %v394 = vld [vmem:[#allocation2 + $0x7e8] sm:$0xff]
    %v395 = vld [vmem:[#allocation2 + $0x7f0] sm:$0xff]
    %v396 = vld [vmem:[#allocation2 + $0x7f8] sm:$0xff]
    %v397 = vld [vmem:[#allocation2 + $0x800] sm:$0xff]
    %v398 = vld [vmem:[#allocation2 + $0x808] sm:$0xff]
    %v399 = vld [vmem:[#allocation2 + $0x810] sm:$0xff]
    %v400 = vld [vmem:[#allocation2 + $0x818] sm:$0xff]
    %v401 = vld [vmem:[#allocation2 + $0x820] sm:$0xff]
    %v402 = vld [vmem:[#allocation2 + $0x828] sm:$0xff]
    %v403 = vld [vmem:[#allocation2 + $0x830] sm:$0xff]
    %v404 = vld [vmem:[#allocation2 + $0x838] sm:$0xff]
    %v405 = vld [vmem:[#allocation2 + $0x840] sm:$0xff]
    %v406 = vld [vmem:[#allocation2 + $0x848] sm:$0xff]
    %v407 = vld [vmem:[#allocation2 + $0x850] sm:$0xff]
    %v408 = vld [vmem:[#allocation2 + $0x858] sm:$0xff]
    %v409 = vld [vmem:[#allocation2 + $0x860] sm:$0xff]
    %v410 = vld [vmem:[#allocation2 + $0x868] sm:$0xff]
    %v411 = vld [vmem:[#allocation2 + $0x870] sm:$0xff]
    %v412 = vld [vmem:[#allocation2 + $0x878] sm:$0xff]
    %v413 = vld [vmem:[#allocation2 + $0x880] sm:$0xff]
    %v414 = vld [vmem:[#allocation2 + $0x888] sm:$0xff]
    %v415 = vld [vmem:[#allocation2 + $0x890] sm:$0xff]
    %v416 = vld [vmem:[#allocation2 + $0x898] sm:$0xff]
    %v417 = vld [vmem:[#allocation2 + $0x8a0] sm:$0xff]
    %v418 = vld [vmem:[#allocation2 + $0x8a8] sm:$0xff]
    %v419 = vld [vmem:[#allocation2 + $0x8b0] sm:$0xff]
    %v420 = vld [vmem:[#allocation2 + $0x8b8] sm:$0xff]
    %v421 = vld [vmem:[#allocation2 + $0x8c0] sm:$0xff]
    %v422 = vld [vmem:[#allocation2 + $0x8c8] sm:$0xff]
    %v423 = vld [vmem:[#allocation2 + $0x8d0] sm:$0xff]
    %v424 = vld [vmem:[#allocation2 + $0x8d8] sm:$0xff]
    %v425 = vld [vmem:[#allocation2 + $0x8e0] sm:$0xff]
    %v426 = vld [vmem:[#allocation2 + $0x8e8] sm:$0xff]
    %v427 = vld [vmem:[#allocation2 + $0x8f0] sm:$0xff]
    %v428 = vld [vmem:[#allocation2 + $0x8f8] sm:$0xff]
    %v429 = vld [vmem:[#allocation2 + $0x900] sm:$0xff]
    %v430 = vld [vmem:[#allocation2 + $0x908] sm:$0xff]
    %v431 = vld [vmem:[#allocation2 + $0x910] sm:$0xff]
    %v432 = vld [vmem:[#allocation2 + $0x918] sm:$0xff]
    %v433 = vld [vmem:[#allocation2 + $0x920] sm:$0xff]
    %v434 = vld [vmem:[#allocation2 + $0x928] sm:$0xff]
    %v435 = vld [vmem:[#allocation2 + $0x930] sm:$0xff]
    %v436 = vld [vmem:[#allocation2 + $0x938] sm:$0xff]
    %v437 = vld [vmem:[#allocation2 + $0x940] sm:$0xff]
    %v438 = vld [vmem:[#allocation2 + $0x948] sm:$0xff]
    %v439 = vld [vmem:[#allocation2 + $0x950] sm:$0xff]
    %v440 = vld [vmem:[#allocation2 + $0x958] sm:$0xff]
    %v441 = vld [vmem:[#allocation2 + $0x960] sm:$0xff]
    %v442 = vld [vmem:[#allocation2 + $0x968] sm:$0xff]
    %v443 = vld [vmem:[#allocation2 + $0x970] sm:$0xff]
    %v444 = vld [vmem:[#allocation2 + $0x978] sm:$0xff]
    %v445 = vld [vmem:[#allocation2 + $0x980] sm:$0xff]
    %v446 = vld [vmem:[#allocation2 + $0x988] sm:$0xff]
    %v447 = vld [vmem:[#allocation2 + $0x990] sm:$0xff]
    %v448 = vld [vmem:[#allocation2 + $0x998] sm:$0xff]
    %v449 = vld [vmem:[#allocation2 + $0x9a0] sm:$0xff]
    %v450 = vld [vmem:[#allocation2 + $0x9a8] sm:$0xff]
    %v451 = vld [vmem:[#allocation2 + $0x9b0] sm:$0xff]
    %v452 = vld [vmem:[#allocation2 + $0x9b8] sm:$0xff]
    %v453 = vld [vmem:[#allocation2 + $0x9c0] sm:$0xff]
    %v454 = vld [vmem:[#allocation2 + $0x9c8] sm:$0xff]
    %v455 = vld [vmem:[#allocation2 + $0x9d0] sm:$0xff]
    %v456 = vld [vmem:[#allocation2 + $0x9d8] sm:$0xff]
    %v457 = vld [vmem:[#allocation2 + $0x9e0] sm:$0xff]
    %v458 = vld [vmem:[#allocation2 + $0x9e8] sm:$0xff]
    %v459 = vld [vmem:[#allocation2 + $0x9f0] sm:$0xff]
    %v460 = vld [vmem:[#allocation2 + $0x9f8] sm:$0xff]
    %v461 = vld [vmem:[#allocation2 + $0xa00] sm:$0xff]
    %v462 = vld [vmem:[#allocation2 + $0xa08] sm:$0xff]
    %v463 = vld [vmem:[#allocation2 + $0xa10] sm:$0xff]
    %v464 = vld [vmem:[#allocation2 + $0xa18] sm:$0xff]
    %v465 = vld [vmem:[#allocation2 + $0xa20] sm:$0xff]
    %v466 = vld [vmem:[#allocation2 + $0xa28] sm:$0xff]
    %v467 = vld [vmem:[#allocation2 + $0xa30] sm:$0xff]
    %v468 = vld [vmem:[#allocation2 + $0xa38] sm:$0xff]
    %v469 = vld [vmem:[#allocation2 + $0xa40] sm:$0xff]
    %v470 = vld [vmem:[#allocation2 + $0xa48] sm:$0xff]
    %v471 = vld [vmem:[#allocation2 + $0xa50] sm:$0xff]
    %v472 = vld [vmem:[#allocation2 + $0xa58] sm:$0xff]
    %v473 = vld [vmem:[#allocation2 + $0xa60] sm:$0xff]
    %v474 = vld [vmem:[#allocation2 + $0xa68] sm:$0xff]
    %v475 = vld [vmem:[#allocation2 + $0xa70] sm:$0xff]
    %v476 = vld [vmem:[#allocation2 + $0xa78] sm:$0xff]
    %v477 = vld [vmem:[#allocation2 + $0xa80] sm:$0xff]
    %v478 = vld [vmem:[#allocation2 + $0xa88] sm:$0xff]
    %v479 = vld [vmem:[#allocation2 + $0xa90] sm:$0xff]
    %v480 = vld [vmem:[#allocation2 + $0xa98] sm:$0xff]
    %v481 = vld [vmem:[#allocation2 + $0xaa0] sm:$0xff]
    %v482 = vld [vmem:[#allocation2 + $0xaa8] sm:$0xff]
    %v483 = vld [vmem:[#allocation2 + $0xab0] sm:$0xff]
    %v484 = vld [vmem:[#allocation2 + $0xab8] sm:$0xff]
    %v485 = vld [vmem:[#allocation2 + $0xac0] sm:$0xff]
    %v486 = vld [vmem:[#allocation2 + $0xac8] sm:$0xff]
    %v487 = vld [vmem:[#allocation2 + $0xad0] sm:$0xff]
    %v488 = vld [vmem:[#allocation2 + $0xad8] sm:$0xff]
    %v489 = vld [vmem:[#allocation2 + $0xae0] sm:$0xff]
    %v490 = vld [vmem:[#allocation2 + $0xae8] sm:$0xff]
    %v491 = vld [vmem:[#allocation2 + $0xaf0] sm:$0xff]
    %v492 = vld [vmem:[#allocation2 + $0xaf8] sm:$0xff]
    %v493 = vld [vmem:[#allocation2 + $0xb00] sm:$0xff]
    %v494 = vld [vmem:[#allocation2 + $0xb08] sm:$0xff]
    %v495 = vld [vmem:[#allocation2 + $0xb10] sm:$0xff]
    %v496 = vld [vmem:[#allocation2 + $0xb18] sm:$0xff]
    %v497 = vld [vmem:[#allocation2 + $0xb20] sm:$0xff]
    %v498 = vld [vmem:[#allocation2 + $0xb28] sm:$0xff]
    %v499 = vld [vmem:[#allocation2 + $0xb30] sm:$0xff]
    %v500 = vld [vmem:[#allocation2 + $0xb38] sm:$0xff]
    %v501 = vld [vmem:[#allocation2 + $0xb40] sm:$0xff]
    %v502 = vld [vmem:[#allocation2 + $0xb48] sm:$0xff]
    %v503 = vld [vmem:[#allocation2 + $0xb50] sm:$0xff]
    %v504 = vld [vmem:[#allocation2 + $0xb58] sm:$0xff]
    %v505 = vld [vmem:[#allocation2 + $0xb60] sm:$0xff]
    %v506 = vld [vmem:[#allocation2 + $0xb68] sm:$0xff]
    %v507 = vld [vmem:[#allocation2 + $0xb70] sm:$0xff]
    %v508 = vld [vmem:[#allocation2 + $0xb78] sm:$0xff]
    %v509 = vld [vmem:[#allocation2 + $0xb80] sm:$0xff]
    %v510 = vld [vmem:[#allocation2 + $0xb88] sm:$0xff]
    %v511 = vld [vmem:[#allocation2 + $0xb90] sm:$0xff]
    %v512 = vld [vmem:[#allocation2 + $0xb98] sm:$0xff]
    %v513 = vld [vmem:[#allocation2 + $0xba0] sm:$0xff]
    %v514 = vld [vmem:[#allocation2 + $0xba8] sm:$0xff]
    %v515 = vld [vmem:[#allocation2 + $0xbb0] sm:$0xff]
    %v516 = vld [vmem:[#allocation2 + $0xbb8] sm:$0xff]
    %v517 = vld [vmem:[#allocation2 + $0xbc0] sm:$0xff]
    %v518 = vld [vmem:[#allocation2 + $0xbc8] sm:$0xff]
    %v519 = vld [vmem:[#allocation2 + $0xbd0] sm:$0xff]
    %v520 = vld [vmem:[#allocation2 + $0xbd8] sm:$0xff]
    %v521 = vld [vmem:[#allocation2 + $0xbe0] sm:$0xff]
    %v522 = vld [vmem:[#allocation2 + $0xbe8] sm:$0xff]
    %v523 = vld [vmem:[#allocation2 + $0xbf0] sm:$0xff]
    %v524 = vld [vmem:[#allocation2 + $0xbf8] sm:$0xff]
    %v525 = vld [vmem:[#allocation2 + $0xc00] sm:$0xff]
    %v526 = vld [vmem:[#allocation2 + $0xc08] sm:$0xff]
    %v527 = vld [vmem:[#allocation2 + $0xc10] sm:$0xff]
    %v528 = vld [vmem:[#allocation2 + $0xc18] sm:$0xff]
    %v529 = vld [vmem:[#allocation2 + $0xc20] sm:$0xff]
    %v530 = vld [vmem:[#allocation2 + $0xc28] sm:$0xff]
    %v531 = vld [vmem:[#allocation2 + $0xc30] sm:$0xff]
    %v532 = vld [vmem:[#allocation2 + $0xc38] sm:$0xff]
    %v533 = vld [vmem:[#allocation2 + $0xc40] sm:$0xff]
    %v534 = vld [vmem:[#allocation2 + $0xc48] sm:$0xff]
    %v535 = vld [vmem:[#allocation2 + $0xc50] sm:$0xff]
    %v536 = vld [vmem:[#allocation2 + $0xc58] sm:$0xff]
    %v537 = vld [vmem:[#allocation2 + $0xc60] sm:$0xff]
    %v538 = vld [vmem:[#allocation2 + $0xc68] sm:$0xff]
    %v539 = vld [vmem:[#allocation2 + $0xc70] sm:$0xff]
    %v540 = vld [vmem:[#allocation2 + $0xc78] sm:$0xff]
    %v541 = vld [vmem:[#allocation2 + $0xc80] sm:$0xff]
    %v542 = vld [vmem:[#allocation2 + $0xc88] sm:$0xff]
    %v543 = vld [vmem:[#allocation2 + $0xc90] sm:$0xff]
    %v544 = vld [vmem:[#allocation2 + $0xc98] sm:$0xff]
    %v545 = vld [vmem:[#allocation2 + $0xca0] sm:$0xff]
    %v546 = vld [vmem:[#allocation2 + $0xca8] sm:$0xff]
    %v547 = vld [vmem:[#allocation2 + $0xcb0] sm:$0xff]
    %v548 = vld [vmem:[#allocation2 + $0xcb8] sm:$0xff]
    %v549 = vld [vmem:[#allocation2 + $0xcc0] sm:$0xff]
    %v550 = vld [vmem:[#allocation2 + $0xcc8] sm:$0xff]
    %v551 = vld [vmem:[#allocation2 + $0xcd0] sm:$0xff]
    %v552 = vld [vmem:[#allocation2 + $0xcd8] sm:$0xff]
    %v553 = vld [vmem:[#allocation2 + $0xce0] sm:$0xff]
    %v554 = vld [vmem:[#allocation2 + $0xce8] sm:$0xff]
    %v555 = vld [vmem:[#allocation2 + $0xcf0] sm:$0xff]
    %v556 = vld [vmem:[#allocation2 + $0xcf8] sm:$0xff]
    %v557 = vld [vmem:[#allocation2 + $0xd00] sm:$0xff]
    %v558 = vld [vmem:[#allocation2 + $0xd08] sm:$0xff]
    %v559 = vld [vmem:[#allocation2 + $0xd10] sm:$0xff]
    %v560 = vld [vmem:[#allocation2 + $0xd18] sm:$0xff]
    %v561 = vld [vmem:[#allocation2 + $0xd20] sm:$0xff]
    %v562 = vld [vmem:[#allocation2 + $0xd28] sm:$0xff]
    %v563 = vld [vmem:[#allocation2 + $0xd30] sm:$0xff]
    %v564 = vld [vmem:[#allocation2 + $0xd38] sm:$0xff]
    %v565 = vld [vmem:[#allocation2 + $0xd40] sm:$0xff]
    %v566 = vld [vmem:[#allocation2 + $0xd48] sm:$0xff]
    %v567 = vld [vmem:[#allocation2 + $0xd50] sm:$0xff]
    %v568 = vld [vmem:[#allocation2 + $0xd58] sm:$0xff]
    %v569 = vld [vmem:[#allocation2 + $0xd60] sm:$0xff]
    %v570 = vld [vmem:[#allocation2 + $0xd68] sm:$0xff]
    %v571 = vld [vmem:[#allocation2 + $0xd70] sm:$0xff]
    %v572 = vld [vmem:[#allocation2 + $0xd78] sm:$0xff]
    %v573 = vld [vmem:[#allocation2 + $0xd80] sm:$0xff]
    %v574 = vld [vmem:[#allocation2 + $0xd88] sm:$0xff]
    %v575 = vld [vmem:[#allocation2 + $0xd90] sm:$0xff]
    %v576 = vld [vmem:[#allocation2 + $0xd98] sm:$0xff]
    %v577 = vld [vmem:[#allocation2 + $0xda0] sm:$0xff]
    %v578 = vld [vmem:[#allocation2 + $0xda8] sm:$0xff]
    %v579 = vld [vmem:[#allocation2 + $0xdb0] sm:$0xff]
    %v580 = vld [vmem:[#allocation2 + $0xdb8] sm:$0xff]
    %v581 = vld [vmem:[#allocation2 + $0xdc0] sm:$0xff]
    %v582 = vld [vmem:[#allocation2 + $0xdc8] sm:$0xff]
    %v583 = vld [vmem:[#allocation2 + $0xdd0] sm:$0xff]
    %v584 = vld [vmem:[#allocation2 + $0xdd8] sm:$0xff]
    %v585 = vld [vmem:[#allocation2 + $0xde0] sm:$0xff]
    %v586 = vld [vmem:[#allocation2 + $0xde8] sm:$0xff]
    %v587 = vld [vmem:[#allocation2 + $0xdf0] sm:$0xff]
    %v588 = vld [vmem:[#allocation2 + $0xdf8] sm:$0xff]
    %v589 = vld [vmem:[#allocation2 + $0xe00] sm:$0xff]
    %v590 = vld [vmem:[#allocation2 + $0xe08] sm:$0xff]
    %v591 = vld [vmem:[#allocation2 + $0xe10] sm:$0xff]
    %v592 = vld [vmem:[#allocation2 + $0xe18] sm:$0xff]
    %v593 = vld [vmem:[#allocation2 + $0xe20] sm:$0xff]
    %v594 = vld [vmem:[#allocation2 + $0xe28] sm:$0xff]
    %v595 = vld [vmem:[#allocation2 + $0xe30] sm:$0xff]
    %v596 = vld [vmem:[#allocation2 + $0xe38] sm:$0xff]
    %v597 = vld [vmem:[#allocation2 + $0xe40] sm:$0xff]
    %v598 = vld [vmem:[#allocation2 + $0xe48] sm:$0xff]
    %v599 = vld [vmem:[#allocation2 + $0xe50] sm:$0xff]
    %v600 = vld [vmem:[#allocation2 + $0xe58] sm:$0xff]
    %v601 = vld [vmem:[#allocation2 + $0xe60] sm:$0xff]
    %v602 = vld [vmem:[#allocation2 + $0xe68] sm:$0xff]
    %v603 = vld [vmem:[#allocation2 + $0xe70] sm:$0xff]
    %v604 = vld [vmem:[#allocation2 + $0xe78] sm:$0xff]
    %v605 = vld [vmem:[#allocation2 + $0xe80] sm:$0xff]
    %v606 = vld [vmem:[#allocation2 + $0xe88] sm:$0xff]
    %v607 = vld [vmem:[#allocation2 + $0xe90] sm:$0xff]
    %v608 = vld [vmem:[#allocation2 + $0xe98] sm:$0xff]
    %v609 = vld [vmem:[#allocation2 + $0xea0] sm:$0xff]
    %v610 = vld [vmem:[#allocation2 + $0xea8] sm:$0xff]
    %v611 = vld [vmem:[#allocation2 + $0xeb0] sm:$0xff]
    %v612 = vld [vmem:[#allocation2 + $0xeb8] sm:$0xff]
    %v613 = vld [vmem:[#allocation2 + $0xec0] sm:$0xff]
    %v614 = vld [vmem:[#allocation2 + $0xec8] sm:$0xff]
    %v615 = vld [vmem:[#allocation2 + $0xed0] sm:$0xff]
    %v616 = vld [vmem:[#allocation2 + $0xed8] sm:$0xff]
    %v617 = vld [vmem:[#allocation2 + $0xee0] sm:$0xff]
    %v618 = vld [vmem:[#allocation2 + $0xee8] sm:$0xff]
    %v619 = vld [vmem:[#allocation2 + $0xef0] sm:$0xff]
    %v620 = vld [vmem:[#allocation2 + $0xef8] sm:$0xff]
    %v621 = vld [vmem:[#allocation2 + $0xf00] sm:$0xff]
    %v622 = vld [vmem:[#allocation2 + $0xf08] sm:$0xff]
    %v623 = vld [vmem:[#allocation2 + $0xf10] sm:$0xff]
    %v624 = vld [vmem:[#allocation2 + $0xf18] sm:$0xff]
    %v625 = vld [vmem:[#allocation2 + $0xf20] sm:$0xff]
    %v626 = vld [vmem:[#allocation2 + $0xf28] sm:$0xff]
    %v627 = vld [vmem:[#allocation2 + $0xf30] sm:$0xff]
    %v628 = vld [vmem:[#allocation2 + $0xf38] sm:$0xff]
    %v629 = vld [vmem:[#allocation2 + $0xf40] sm:$0xff]
    %v630 = vld [vmem:[#allocation2 + $0xf48] sm:$0xff]
    %v631 = vld [vmem:[#allocation2 + $0xf50] sm:$0xff]
    %v632 = vld [vmem:[#allocation2 + $0xf58] sm:$0xff]
    %v633 = vld [vmem:[#allocation2 + $0xf60] sm:$0xff]
    %v634 = vld [vmem:[#allocation2 + $0xf68] sm:$0xff]
    %v635 = vld [vmem:[#allocation2 + $0xf70] sm:$0xff]
    %v636 = vld [vmem:[#allocation2 + $0xf78] sm:$0xff]
    %v637 = vld [vmem:[#allocation2 + $0xf80] sm:$0xff]
    %v638 = vld [vmem:[#allocation2 + $0xf88] sm:$0xff]
    %v639 = vld [vmem:[#allocation2 + $0xf90] sm:$0xff]
    %v640 = vld [vmem:[#allocation2 + $0xf98] sm:$0xff]
    %v641 = vld [vmem:[#allocation2 + $0xfa0] sm:$0xff]
    %v642 = vld [vmem:[#allocation2 + $0xfa8] sm:$0xff]
    %v643 = vld [vmem:[#allocation2 + $0xfb0] sm:$0xff]
    %v644 = vld [vmem:[#allocation2 + $0xfb8] sm:$0xff]
    %v645 = vld [vmem:[#allocation2 + $0xfc0] sm:$0xff]
    %v646 = vld [vmem:[#allocation2 + $0xfc8] sm:$0xff]
    %v647 = vld [vmem:[#allocation2 + $0xfd0] sm:$0xff]
    %v648 = vld [vmem:[#allocation2 + $0xfd8] sm:$0xff]
    %v649 = vld [vmem:[#allocation2 + $0xfe0] sm:$0xff]
    %v650 = vld [vmem:[#allocation2 + $0xfe8] sm:$0xff]
    %v651 = vld [vmem:[#allocation2 + $0xff0] sm:$0xff]
    %v652 = vld [vmem:[#allocation2 + $0xff8] sm:$0xff]
    %v653 = vld [vmem:[#allocation4] sm:$0xf]
    %v655 = vlaneseq
    %v656 = vshrl.u32 %v655, 7
    %v657 = vsub.s32 0, %v656
    %v658 = vrot.slane %v653, %v657
    %v659 = vlaneseq
    %v660 = vshrl.u32 %v659, 7
    %v661 = vsub.s32 1, %v660
    %v662 = vrot.slane %v653, %v661
    %v663 = vlaneseq
    %v664 = vshrl.u32 %v663, 7
    %v665 = vsub.s32 2, %v664
    %v666 = vrot.slane %v653, %v665
    %v667 = vlaneseq
    %v668 = vshrl.u32 %v667, 7
    %v669 = vsub.s32 3, %v668
    %v670 = vrot.slane %v653, %v669
    %675 = vmatprep.subr.mxu0 %v202
    %676 = vmatpush1.msra.mxu0 %v201
    %677 = vmatprep.subr.mxu0 %v198
    %678 = vmatpush1.msra.mxu0 %v197
    %679 = vmatprep.subr.mxu0 %v194
    %680 = vmatpush1.msra.mxu0 %v193
    %681 = vmatprep.subr.mxu0 %v190
    %682 = vmatpush1.msra.mxu0 %v189
    %683 = vmatprep.subr.mxu0 %v186
    %684 = vmatpush1.msra.mxu0 %v185
    %685 = vmatprep.subr.mxu0 %v182
    %686 = vmatpush1.msra.mxu0 %v181
    %687 = vmatprep.subr.mxu0 %v178
    %688 = vmatpush1.msra.mxu0 %v177
    %689 = vmatprep.subr.mxu0 %v174
    %690 = vmatpush1.msra.mxu0 %v173
    %691 = vmatprep.subr.mxu0 %v170
    %692 = vmatpush1.msra.mxu0 %v169
    %693 = vmatprep.subr.mxu0 %v166
    %694 = vmatpush1.msra.mxu0 %v165
    %695 = vmatprep.subr.mxu0 %v162
    %696 = vmatpush1.msra.mxu0 %v161
    %697 = vmatprep.subr.mxu0 %v158
    %698 = vmatpush1.msra.mxu0 %v157
    %699 = vmatprep.subr.mxu0 %v154
    %700 = vmatpush1.msra.mxu0 %v153
    %701 = vmatprep.subr.mxu0 %v150
    %702 = vmatpush1.msra.mxu0 %v149
    %703 = vmatprep.subr.mxu0 %v146
    %704 = vmatpush1.msra.mxu0 %v145
    %705 = vmatprep.subr.mxu0 %v142
    %706 = vmatpush1.msra.mxu0 %v141
    %707 = vmatprep.subr.mxu0 %v266
    %708 = vmatpush2.msra.mxu0 %v265
    %709 = vmatprep.subr.mxu0 %v262
    %710 = vmatpush2.msra.mxu0 %v261
    %711 = vmatprep.subr.mxu0 %v258
    %712 = vmatpush2.msra.mxu0 %v257
    %713 = vmatprep.subr.mxu0 %v254
    %714 = vmatpush2.msra.mxu0 %v253
    %715 = vmatprep.subr.mxu0 %v250
    %716 = vmatpush2.msra.mxu0 %v249
    %717 = vmatprep.subr.mxu0 %v246
    %718 = vmatpush2.msra.mxu0 %v245
    %719 = vmatprep.subr.mxu0 %v242
    %720 = vmatpush2.msra.mxu0 %v241
    %721 = vmatprep.subr.mxu0 %v238
    %722 = vmatpush2.msra.mxu0 %v237
    %723 = vmatprep.subr.mxu0 %v234
    %724 = vmatpush2.msra.mxu0 %v233
    %725 = vmatprep.subr.mxu0 %v230
    %726 = vmatpush2.msra.mxu0 %v229
    %727 = vmatprep.subr.mxu0 %v226
    %728 = vmatpush2.msra.mxu0 %v225
    %729 = vmatprep.subr.mxu0 %v222
    %730 = vmatpush2.msra.mxu0 %v221
    %731 = vmatprep.subr.mxu0 %v218
    %732 = vmatpush2.msra.mxu0 %v217
    %733 = vmatprep.subr.mxu0 %v214
    %734 = vmatpush2.msra.mxu0 %v213
    %735 = vmatprep.subr.mxu0 %v210
    %736 = vmatpush2.msra.mxu0 %v209
    %737 = vmatprep.subr.mxu0 %v206
    %738 = vmatpush2.msra.mxu0 %v205
    %739 = vmatprep.mubr.f32.mxu0 %v134
    %740 = vmatmul.mubr.f32.gmra.mxu0 %v133
    %v741 = vpop.f32.mrf.mxu0
    %v742 = vadd.f32 %v658, %v741
    %v743 = vpop.f32.mrf.mxu0
    %v744 = vadd.f32 %v662, %v743
    %745 = vdwg.mxu0
    %746 = vmatprep.subr.mxu0 %v330
    %747 = vmatpush1.msra.mxu0 %v329
    %748 = vmatprep.subr.mxu0 %v326
    %749 = vmatpush1.msra.mxu0 %v325
    %750 = vmatprep.subr.mxu0 %v322
    %751 = vmatpush1.msra.mxu0 %v321
    %752 = vmatprep.subr.mxu0 %v318
    %753 = vmatpush1.msra.mxu0 %v317
    %754 = vmatprep.subr.mxu0 %v314
    %755 = vmatpush1.msra.mxu0 %v313
    %756 = vmatprep.subr.mxu0 %v310
    %757 = vmatpush1.msra.mxu0 %v309
    %758 = vmatprep.subr.mxu0 %v306
    %759 = vmatpush1.msra.mxu0 %v305
    %760 = vmatprep.subr.mxu0 %v302
    %761 = vmatpush1.msra.mxu0 %v301
    %762 = vmatprep.subr.mxu0 %v298
    %763 = vmatpush1.msra.mxu0 %v297
    %764 = vmatprep.subr.mxu0 %v294
    %765 = vmatpush1.msra.mxu0 %v293
    %766 = vmatprep.subr.mxu0 %v290
    %767 = vmatpush1.msra.mxu0 %v289
    %768 = vmatprep.subr.mxu0 %v286
    %769 = vmatpush1.msra.mxu0 %v285
    %770 = vmatprep.subr.mxu0 %v282
    %771 = vmatpush1.msra.mxu0 %v281
    %772 = vmatprep.subr.mxu0 %v278
    %773 = vmatpush1.msra.mxu0 %v277
    %774 = vmatprep.subr.mxu0 %v274
    %775 = vmatpush1.msra.mxu0 %v273
    %776 = vmatprep.subr.mxu0 %v270
    %777 = vmatpush1.msra.mxu0 %v269
    %778 = vmatprep.subr.mxu0 %v394
    %779 = vmatpush2.msra.mxu0 %v393
    %780 = vmatprep.subr.mxu0 %v390
    %781 = vmatpush2.msra.mxu0 %v389
    %782 = vmatprep.subr.mxu0 %v386
    %783 = vmatpush2.msra.mxu0 %v385
    %784 = vmatprep.subr.mxu0 %v382
    %785 = vmatpush2.msra.mxu0 %v381
    %786 = vmatprep.subr.mxu0 %v378
    %787 = vmatpush2.msra.mxu0 %v377
    %788 = vmatprep.subr.mxu0 %v374
    %789 = vmatpush2.msra.mxu0 %v373
    %790 = vmatprep.subr.mxu0 %v370
    %791 = vmatpush2.msra.mxu0 %v369
    %792 = vmatprep.subr.mxu0 %v366
    %793 = vmatpush2.msra.mxu0 %v365
    %794 = vmatprep.subr.mxu0 %v362
    %795 = vmatpush2.msra.mxu0 %v361
    %796 = vmatprep.subr.mxu0 %v358
    %797 = vmatpush2.msra.mxu0 %v357
    %798 = vmatprep.subr.mxu0 %v354
    %799 = vmatpush2.msra.mxu0 %v353
    %800 = vmatprep.subr.mxu0 %v350
    %801 = vmatpush2.msra.mxu0 %v349
    %802 = vmatprep.subr.mxu0 %v346
    %803 = vmatpush2.msra.mxu0 %v345
    %804 = vmatprep.subr.mxu0 %v342
    %805 = vmatpush2.msra.mxu0 %v341
    %806 = vmatprep.subr.mxu0 %v338
    %807 = vmatpush2.msra.mxu0 %v337
    %808 = vmatprep.subr.mxu0 %v334
    %809 = vmatpush2.msra.mxu0 %v333
    %810 = vmatprep.mubr.f32.mxu0 %v136
    %811 = vmatmul.mubr.f32.gmra.mxu0 %v135
    %v812 = vpop.f32.mrf.mxu0
    %v813 = vadd.f32 %v742, %v812
    %v814 = vpop.f32.mrf.mxu0
    %v815 = vadd.f32 %v744, %v814
    %816 = vdwg.mxu0
    %817 = vmatprep.subr.mxu0 %v458
    %818 = vmatpush1.msra.mxu0 %v457
    %819 = vmatprep.subr.mxu0 %v454
    %820 = vmatpush1.msra.mxu0 %v453
    %821 = vmatprep.subr.mxu0 %v450
    %822 = vmatpush1.msra.mxu0 %v449
    %823 = vmatprep.subr.mxu0 %v446
    %824 = vmatpush1.msra.mxu0 %v445
    %825 = vmatprep.subr.mxu0 %v442
    %826 = vmatpush1.msra.mxu0 %v441
    %827 = vmatprep.subr.mxu0 %v438
    %828 = vmatpush1.msra.mxu0 %v437
    %829 = vmatprep.subr.mxu0 %v434
    %830 = vmatpush1.msra.mxu0 %v433
    %831 = vmatprep.subr.mxu0 %v430
    %832 = vmatpush1.msra.mxu0 %v429
    %833 = vmatprep.subr.mxu0 %v426
    %834 = vmatpush1.msra.mxu0 %v425
    %835 = vmatprep.subr.mxu0 %v422
    %836 = vmatpush1.msra.mxu0 %v421
    %837 = vmatprep.subr.mxu0 %v418
    %838 = vmatpush1.msra.mxu0 %v417
    %839 = vmatprep.subr.mxu0 %v414
    %840 = vmatpush1.msra.mxu0 %v413
    %841 = vmatprep.subr.mxu0 %v410
    %842 = vmatpush1.msra.mxu0 %v409
    %843 = vmatprep.subr.mxu0 %v406
    %844 = vmatpush1.msra.mxu0 %v405
    %845 = vmatprep.subr.mxu0 %v402
    %846 = vmatpush1.msra.mxu0 %v401
    %847 = vmatprep.subr.mxu0 %v398
    %848 = vmatpush1.msra.mxu0 %v397
    %849 = vmatprep.subr.mxu0 %v522
    %850 = vmatpush2.msra.mxu0 %v521
    %851 = vmatprep.subr.mxu0 %v518
    %852 = vmatpush2.msra.mxu0 %v517
    %853 = vmatprep.subr.mxu0 %v514
    %854 = vmatpush2.msra.mxu0 %v513
    %855 = vmatprep.subr.mxu0 %v510
    %856 = vmatpush2.msra.mxu0 %v509
    %857 = vmatprep.subr.mxu0 %v506
    %858 = vmatpush2.msra.mxu0 %v505
    %859 = vmatprep.subr.mxu0 %v502
    %860 = vmatpush2.msra.mxu0 %v501
    %861 = vmatprep.subr.mxu0 %v498
    %862 = vmatpush2.msra.mxu0 %v497
    %863 = vmatprep.subr.mxu0 %v494
    %864 = vmatpush2.msra.mxu0 %v493
    %865 = vmatprep.subr.mxu0 %v490
    %866 = vmatpush2.msra.mxu0 %v489
    %867 = vmatprep.subr.mxu0 %v486
    %868 = vmatpush2.msra.mxu0 %v485
    %869 = vmatprep.subr.mxu0 %v482
    %870 = vmatpush2.msra.mxu0 %v481
    %871 = vmatprep.subr.mxu0 %v478
    %872 = vmatpush2.msra.mxu0 %v477
    %873 = vmatprep.subr.mxu0 %v474
    %874 = vmatpush2.msra.mxu0 %v473
    %875 = vmatprep.subr.mxu0 %v470
    %876 = vmatpush2.msra.mxu0 %v469
    %877 = vmatprep.subr.mxu0 %v466
    %878 = vmatpush2.msra.mxu0 %v465
    %879 = vmatprep.subr.mxu0 %v462
    %880 = vmatpush2.msra.mxu0 %v461
    %881 = vmatprep.mubr.f32.mxu0 %v138
    %882 = vmatmul.mubr.f32.gmra.mxu0 %v137
    %v883 = vpop.f32.mrf.mxu0
    %v884 = vadd.f32 %v813, %v883
    %v885 = vpop.f32.mrf.mxu0
    %v886 = vadd.f32 %v815, %v885
    %887 = vdwg.mxu0
    %888 = vmatprep.subr.mxu0 %v586
    %889 = vmatpush1.msra.mxu0 %v585
    %890 = vmatprep.subr.mxu0 %v582
    %891 = vmatpush1.msra.mxu0 %v581
    %892 = vmatprep.subr.mxu0 %v578
    %893 = vmatpush1.msra.mxu0 %v577
    %894 = vmatprep.subr.mxu0 %v574
    %895 = vmatpush1.msra.mxu0 %v573
    %896 = vmatprep.subr.mxu0 %v570
    %897 = vmatpush1.msra.mxu0 %v569
    %898 = vmatprep.subr.mxu0 %v566
    %899 = vmatpush1.msra.mxu0 %v565
    %900 = vmatprep.subr.mxu0 %v562
    %901 = vmatpush1.msra.mxu0 %v561
    %902 = vmatprep.subr.mxu0 %v558
    %903 = vmatpush1.msra.mxu0 %v557
    %904 = vmatprep.subr.mxu0 %v554
    %905 = vmatpush1.msra.mxu0 %v553
    %906 = vmatprep.subr.mxu0 %v550
    %907 = vmatpush1.msra.mxu0 %v549
    %908 = vmatprep.subr.mxu0 %v546
    %909 = vmatpush1.msra.mxu0 %v545
    %910 = vmatprep.subr.mxu0 %v542
    %911 = vmatpush1.msra.mxu0 %v541
    %912 = vmatprep.subr.mxu0 %v538
    %913 = vmatpush1.msra.mxu0 %v537
    %914 = vmatprep.subr.mxu0 %v534
    %915 = vmatpush1.msra.mxu0 %v533
    %916 = vmatprep.subr.mxu0 %v530
    %917 = vmatpush1.msra.mxu0 %v529
    %918 = vmatprep.subr.mxu0 %v526
    %919 = vmatpush1.msra.mxu0 %v525
    %920 = vmatprep.subr.mxu0 %v650
    %921 = vmatpush2.msra.mxu0 %v649
    %922 = vmatprep.subr.mxu0 %v646
    %923 = vmatpush2.msra.mxu0 %v645
    %924 = vmatprep.subr.mxu0 %v642
    %925 = vmatpush2.msra.mxu0 %v641
    %926 = vmatprep.subr.mxu0 %v638
    %927 = vmatpush2.msra.mxu0 %v637
    %928 = vmatprep.subr.mxu0 %v634
    %929 = vmatpush2.msra.mxu0 %v633
    %930 = vmatprep.subr.mxu0 %v630
    %931 = vmatpush2.msra.mxu0 %v629
    %932 = vmatprep.subr.mxu0 %v626
    %933 = vmatpush2.msra.mxu0 %v625
    %934 = vmatprep.subr.mxu0 %v622
    %935 = vmatpush2.msra.mxu0 %v621
    %936 = vmatprep.subr.mxu0 %v618
    %937 = vmatpush2.msra.mxu0 %v617
    %938 = vmatprep.subr.mxu0 %v614
    %939 = vmatpush2.msra.mxu0 %v613
    %940 = vmatprep.subr.mxu0 %v610
    %941 = vmatpush2.msra.mxu0 %v609
    %942 = vmatprep.subr.mxu0 %v606
    %943 = vmatpush2.msra.mxu0 %v605
    %944 = vmatprep.subr.mxu0 %v602
    %945 = vmatpush2.msra.mxu0 %v601
    %946 = vmatprep.subr.mxu0 %v598
    %947 = vmatpush2.msra.mxu0 %v597
    %948 = vmatprep.subr.mxu0 %v594
    %949 = vmatpush2.msra.mxu0 %v593
    %950 = vmatprep.subr.mxu0 %v590
    %951 = vmatpush2.msra.mxu0 %v589
    %952 = vmatprep.mubr.f32.mxu0 %v140
    %953 = vmatmul.mubr.f32.gmra.mxu0 %v139
    %v954 = vpop.f32.mrf.mxu0
    %v955 = vadd.f32 %v884, %v954
    %v956 = vpop.f32.mrf.mxu0
    %v957 = vadd.f32 %v886, %v956
    %958 = vdwg.mxu0
    %959 = vmatprep.subr.mxu0 %v204
    %960 = vmatpush1.msra.mxu0 %v203
    %961 = vmatprep.subr.mxu0 %v200
    %962 = vmatpush1.msra.mxu0 %v199
    %963 = vmatprep.subr.mxu0 %v196
    %964 = vmatpush1.msra.mxu0 %v195
    %965 = vmatprep.subr.mxu0 %v192
    %966 = vmatpush1.msra.mxu0 %v191
    %967 = vmatprep.subr.mxu0 %v188
    %968 = vmatpush1.msra.mxu0 %v187
    %969 = vmatprep.subr.mxu0 %v184
    %970 = vmatpush1.msra.mxu0 %v183
    %971 = vmatprep.subr.mxu0 %v180
    %972 = vmatpush1.msra.mxu0 %v179
    %973 = vmatprep.subr.mxu0 %v176
    %974 = vmatpush1.msra.mxu0 %v175
    %975 = vmatprep.subr.mxu0 %v172
    %976 = vmatpush1.msra.mxu0 %v171
    %977 = vmatprep.subr.mxu0 %v168
    %978 = vmatpush1.msra.mxu0 %v167
    %979 = vmatprep.subr.mxu0 %v164
    %980 = vmatpush1.msra.mxu0 %v163
    %981 = vmatprep.subr.mxu0 %v160
    %982 = vmatpush1.msra.mxu0 %v159
    %983 = vmatprep.subr.mxu0 %v156
    %984 = vmatpush1.msra.mxu0 %v155
    %985 = vmatprep.subr.mxu0 %v152
    %986 = vmatpush1.msra.mxu0 %v151
    %987 = vmatprep.subr.mxu0 %v148
    %988 = vmatpush1.msra.mxu0 %v147
    %989 = vmatprep.subr.mxu0 %v144
    %990 = vmatpush1.msra.mxu0 %v143
    %991 = vmatprep.subr.mxu0 %v268
    %992 = vmatpush2.msra.mxu0 %v267
    %993 = vmatprep.subr.mxu0 %v264
    %994 = vmatpush2.msra.mxu0 %v263
    %995 = vmatprep.subr.mxu0 %v260
    %996 = vmatpush2.msra.mxu0 %v259
    %997 = vmatprep.subr.mxu0 %v256
    %998 = vmatpush2.msra.mxu0 %v255
    %999 = vmatprep.subr.mxu0 %v252
    %1000 = vmatpush2.msra.mxu0 %v251
    %1001 = vmatprep.subr.mxu0 %v248
    %1002 = vmatpush2.msra.mxu0 %v247
    %1003 = vmatprep.subr.mxu0 %v244
    %1004 = vmatpush2.msra.mxu0 %v243
    %1005 = vmatprep.subr.mxu0 %v240
    %1006 = vmatpush2.msra.mxu0 %v239
    %1007 = vmatprep.subr.mxu0 %v236
    %1008 = vmatpush2.msra.mxu0 %v235
    %1009 = vmatprep.subr.mxu0 %v232
    %1010 = vmatpush2.msra.mxu0 %v231
    %1011 = vmatprep.subr.mxu0 %v228
    %1012 = vmatpush2.msra.mxu0 %v227
    %1013 = vmatprep.subr.mxu0 %v224
    %1014 = vmatpush2.msra.mxu0 %v223
    %1015 = vmatprep.subr.mxu0 %v220
    %1016 = vmatpush2.msra.mxu0 %v219
    %1017 = vmatprep.subr.mxu0 %v216
    %1018 = vmatpush2.msra.mxu0 %v215
    %1019 = vmatprep.subr.mxu0 %v212
    %1020 = vmatpush2.msra.mxu0 %v211
    %1021 = vmatprep.subr.mxu0 %v208
    %1022 = vmatpush2.msra.mxu0 %v207
    %1023 = vmatprep.mubr.f32.mxu0 %v134
    %1024 = vmatmul.mubr.f32.gmra.mxu0 %v133
    %v1025 = vpop.f32.mrf.mxu0
    %v1026 = vadd.f32 %v666, %v1025
    %v1027 = vpop.f32.mrf.mxu0
    %v1028 = vadd.f32 %v670, %v1027
    %1029 = vdwg.mxu0
    %1030 = vmatprep.subr.mxu0 %v332
    %1031 = vmatpush1.msra.mxu0 %v331
    %1032 = vmatprep.subr.mxu0 %v328
    %1033 = vmatpush1.msra.mxu0 %v327
    %1034 = vmatprep.subr.mxu0 %v324
    %1035 = vmatpush1.msra.mxu0 %v323
    %1036 = vmatprep.subr.mxu0 %v320
    %1037 = vmatpush1.msra.mxu0 %v319
    %1038 = vmatprep.subr.mxu0 %v316
    %1039 = vmatpush1.msra.mxu0 %v315
    %1040 = vmatprep.subr.mxu0 %v312
    %1041 = vmatpush1.msra.mxu0 %v311
    %1042 = vmatprep.subr.mxu0 %v308
    %1043 = vmatpush1.msra.mxu0 %v307
    %1044 = vmatprep.subr.mxu0 %v304
    %1045 = vmatpush1.msra.mxu0 %v303
    %1046 = vmatprep.subr.mxu0 %v300
    %1047 = vmatpush1.msra.mxu0 %v299
    %1048 = vmatprep.subr.mxu0 %v296
    %1049 = vmatpush1.msra.mxu0 %v295
    %1050 = vmatprep.subr.mxu0 %v292
    %1051 = vmatpush1.msra.mxu0 %v291
    %1052 = vmatprep.subr.mxu0 %v288
    %1053 = vmatpush1.msra.mxu0 %v287
    %1054 = vmatprep.subr.mxu0 %v284
    %1055 = vmatpush1.msra.mxu0 %v283
    %1056 = vmatprep.subr.mxu0 %v280
    %1057 = vmatpush1.msra.mxu0 %v279
    %1058 = vmatprep.subr.mxu0 %v276
    %1059 = vmatpush1.msra.mxu0 %v275
    %1060 = vmatprep.subr.mxu0 %v272
    %1061 = vmatpush1.msra.mxu0 %v271
    %1062 = vmatprep.subr.mxu0 %v396
    %1063 = vmatpush2.msra.mxu0 %v395
    %1064 = vmatprep.subr.mxu0 %v392
    %1065 = vmatpush2.msra.mxu0 %v391
    %1066 = vmatprep.subr.mxu0 %v388
    %1067 = vmatpush2.msra.mxu0 %v387
    %1068 = vmatprep.subr.mxu0 %v384
    %1069 = vmatpush2.msra.mxu0 %v383
    %1070 = vmatprep.subr.mxu0 %v380
    %1071 = vmatpush2.msra.mxu0 %v379
    %1072 = vmatprep.subr.mxu0 %v376
    %1073 = vmatpush2.msra.mxu0 %v375
    %1074 = vmatprep.subr.mxu0 %v372
    %1075 = vmatpush2.msra.mxu0 %v371
    %1076 = vmatprep.subr.mxu0 %v368
    %1077 = vmatpush2.msra.mxu0 %v367
    %1078 = vmatprep.subr.mxu0 %v364
    %1079 = vmatpush2.msra.mxu0 %v363
    %1080 = vmatprep.subr.mxu0 %v360
    %1081 = vmatpush2.msra.mxu0 %v359
    %1082 = vmatprep.subr.mxu0 %v356
    %1083 = vmatpush2.msra.mxu0 %v355
    %1084 = vmatprep.subr.mxu0 %v352
    %1085 = vmatpush2.msra.mxu0 %v351
    %1086 = vmatprep.subr.mxu0 %v348
    %1087 = vmatpush2.msra.mxu0 %v347
    %1088 = vmatprep.subr.mxu0 %v344
    %1089 = vmatpush2.msra.mxu0 %v343
    %1090 = vmatprep.subr.mxu0 %v340
    %1091 = vmatpush2.msra.mxu0 %v339
    %1092 = vmatprep.subr.mxu0 %v336
    %1093 = vmatpush2.msra.mxu0 %v335
    %1094 = vmatprep.mubr.f32.mxu0 %v136
    %1095 = vmatmul.mubr.f32.gmra.mxu0 %v135
    %v1096 = vpop.f32.mrf.mxu0
    %v1097 = vadd.f32 %v1026, %v1096
    %v1098 = vpop.f32.mrf.mxu0
    %v1099 = vadd.f32 %v1028, %v1098
    %1100 = vdwg.mxu0
    %1101 = vmatprep.subr.mxu0 %v460
    %1102 = vmatpush1.msra.mxu0 %v459
    %1103 = vmatprep.subr.mxu0 %v456
    %1104 = vmatpush1.msra.mxu0 %v455
    %1105 = vmatprep.subr.mxu0 %v452
    %1106 = vmatpush1.msra.mxu0 %v451
    %1107 = vmatprep.subr.mxu0 %v448
    %1108 = vmatpush1.msra.mxu0 %v447
    %1109 = vmatprep.subr.mxu0 %v444
    %1110 = vmatpush1.msra.mxu0 %v443
    %1111 = vmatprep.subr.mxu0 %v440
    %1112 = vmatpush1.msra.mxu0 %v439
    %1113 = vmatprep.subr.mxu0 %v436
    %1114 = vmatpush1.msra.mxu0 %v435
    %1115 = vmatprep.subr.mxu0 %v432
    %1116 = vmatpush1.msra.mxu0 %v431
    %1117 = vmatprep.subr.mxu0 %v428
    %1118 = vmatpush1.msra.mxu0 %v427
    %1119 = vmatprep.subr.mxu0 %v424
    %1120 = vmatpush1.msra.mxu0 %v423
    %1121 = vmatprep.subr.mxu0 %v420
    %1122 = vmatpush1.msra.mxu0 %v419
    %1123 = vmatprep.subr.mxu0 %v416
    %1124 = vmatpush1.msra.mxu0 %v415
    %1125 = vmatprep.subr.mxu0 %v412
    %1126 = vmatpush1.msra.mxu0 %v411
    %1127 = vmatprep.subr.mxu0 %v408
    %1128 = vmatpush1.msra.mxu0 %v407
    %1129 = vmatprep.subr.mxu0 %v404
    %1130 = vmatpush1.msra.mxu0 %v403
    %1131 = vmatprep.subr.mxu0 %v400
    %1132 = vmatpush1.msra.mxu0 %v399
    %1133 = vmatprep.subr.mxu0 %v524
    %1134 = vmatpush2.msra.mxu0 %v523
    %1135 = vmatprep.subr.mxu0 %v520
    %1136 = vmatpush2.msra.mxu0 %v519
    %1137 = vmatprep.subr.mxu0 %v516
    %1138 = vmatpush2.msra.mxu0 %v515
    %1139 = vmatprep.subr.mxu0 %v512
    %1140 = vmatpush2.msra.mxu0 %v511
    %1141 = vmatprep.subr.mxu0 %v508
    %1142 = vmatpush2.msra.mxu0 %v507
    %1143 = vmatprep.subr.mxu0 %v504
    %1144 = vmatpush2.msra.mxu0 %v503
    %1145 = vmatprep.subr.mxu0 %v500
    %1146 = vmatpush2.msra.mxu0 %v499
    %1147 = vmatprep.subr.mxu0 %v496
    %1148 = vmatpush2.msra.mxu0 %v495
    %1149 = vmatprep.subr.mxu0 %v492
    %1150 = vmatpush2.msra.mxu0 %v491
    %1151 = vmatprep.subr.mxu0 %v488
    %1152 = vmatpush2.msra.mxu0 %v487
    %1153 = vmatprep.subr.mxu0 %v484
    %1154 = vmatpush2.msra.mxu0 %v483
    %1155 = vmatprep.subr.mxu0 %v480
    %1156 = vmatpush2.msra.mxu0 %v479
    %1157 = vmatprep.subr.mxu0 %v476
    %1158 = vmatpush2.msra.mxu0 %v475
    %1159 = vmatprep.subr.mxu0 %v472
    %1160 = vmatpush2.msra.mxu0 %v471
    %1161 = vmatprep.subr.mxu0 %v468
    %1162 = vmatpush2.msra.mxu0 %v467
    %1163 = vmatprep.subr.mxu0 %v464
    %1164 = vmatpush2.msra.mxu0 %v463
    %1165 = vmatprep.mubr.f32.mxu0 %v138
    %1166 = vmatmul.mubr.f32.gmra.mxu0 %v137
    %v1167 = vpop.f32.mrf.mxu0
    %v1168 = vadd.f32 %v1097, %v1167
    %v1169 = vpop.f32.mrf.mxu0
    %v1170 = vadd.f32 %v1099, %v1169
    %1171 = vdwg.mxu0
    %1172 = vmatprep.subr.mxu0 %v588
    %1173 = vmatpush1.msra.mxu0 %v587
    %1174 = vmatprep.subr.mxu0 %v584
    %1175 = vmatpush1.msra.mxu0 %v583
    %1176 = vmatprep.subr.mxu0 %v580
    %1177 = vmatpush1.msra.mxu0 %v579
    %1178 = vmatprep.subr.mxu0 %v576
    %1179 = vmatpush1.msra.mxu0 %v575
    %1180 = vmatprep.subr.mxu0 %v572
    %1181 = vmatpush1.msra.mxu0 %v571
    %1182 = vmatprep.subr.mxu0 %v568
    %1183 = vmatpush1.msra.mxu0 %v567
    %1184 = vmatprep.subr.mxu0 %v564
    %1185 = vmatpush1.msra.mxu0 %v563
    %1186 = vmatprep.subr.mxu0 %v560
    %1187 = vmatpush1.msra.mxu0 %v559
    %1188 = vmatprep.subr.mxu0 %v556
    %1189 = vmatpush1.msra.mxu0 %v555
    %1190 = vmatprep.subr.mxu0 %v552
    %1191 = vmatpush1.msra.mxu0 %v551
    %1192 = vmatprep.subr.mxu0 %v548
    %1193 = vmatpush1.msra.mxu0 %v547
    %1194 = vmatprep.subr.mxu0 %v544
    %1195 = vmatpush1.msra.mxu0 %v543
    %1196 = vmatprep.subr.mxu0 %v540
    %1197 = vmatpush1.msra.mxu0 %v539
    %1198 = vmatprep.subr.mxu0 %v536
    %1199 = vmatpush1.msra.mxu0 %v535
    %1200 = vmatprep.subr.mxu0 %v532
    %1201 = vmatpush1.msra.mxu0 %v531
    %1202 = vmatprep.subr.mxu0 %v528
    %1203 = vmatpush1.msra.mxu0 %v527
    %1204 = vmatprep.subr.mxu0 %v652
    %1205 = vmatpush2.msra.mxu0 %v651
    %1206 = vmatprep.subr.mxu0 %v648
    %1207 = vmatpush2.msra.mxu0 %v647
    %1208 = vmatprep.subr.mxu0 %v644
    %1209 = vmatpush2.msra.mxu0 %v643
    %1210 = vmatprep.subr.mxu0 %v640
    %1211 = vmatpush2.msra.mxu0 %v639
    %1212 = vmatprep.subr.mxu0 %v636
    %1213 = vmatpush2.msra.mxu0 %v635
    %1214 = vmatprep.subr.mxu0 %v632
    %1215 = vmatpush2.msra.mxu0 %v631
    %1216 = vmatprep.subr.mxu0 %v628
    %1217 = vmatpush2.msra.mxu0 %v627
    %1218 = vmatprep.subr.mxu0 %v624
    %1219 = vmatpush2.msra.mxu0 %v623
    %1220 = vmatprep.subr.mxu0 %v620
    %1221 = vmatpush2.msra.mxu0 %v619
    %1222 = vmatprep.subr.mxu0 %v616
    %1223 = vmatpush2.msra.mxu0 %v615
    %1224 = vmatprep.subr.mxu0 %v612
    %1225 = vmatpush2.msra.mxu0 %v611
    %1226 = vmatprep.subr.mxu0 %v608
    %1227 = vmatpush2.msra.mxu0 %v607
    %1228 = vmatprep.subr.mxu0 %v604
    %1229 = vmatpush2.msra.mxu0 %v603
    %1230 = vmatprep.subr.mxu0 %v600
    %1231 = vmatpush2.msra.mxu0 %v599
    %1232 = vmatprep.subr.mxu0 %v596
    %1233 = vmatpush2.msra.mxu0 %v595
    %1234 = vmatprep.subr.mxu0 %v592
    %1235 = vmatpush2.msra.mxu0 %v591
    %1236 = vmatprep.mubr.f32.mxu0 %v140
    %1237 = vmatmul.mubr.f32.gmra.mxu0 %v139
    %v1238 = vpop.f32.mrf.mxu0
    %v1239 = vadd.f32 %v1168, %v1238
    %v1240 = vpop.f32.mrf.mxu0
    %v1241 = vadd.f32 %v1170, %v1240
    %1242 = vdwg.mxu0
    %v1243 = vmax.f32 %v955, 0.0
    %v1244 = vmax.f32 %v957, 0.0
    %v1245 = vmax.f32 %v1239, 0.0
    %v1246 = vmax.f32 %v1241, 0.0
    %v1247 = vld [vmem:[#allocation6] sm:$0xff]
    %v1248 = vld [vmem:[#allocation6 + $0x8] sm:$0xff]
    %v1249 = vld [vmem:[#allocation6 + $0x10] sm:$0xff]
    %v1250 = vld [vmem:[#allocation6 + $0x18] sm:$0xff]
    %v1251 = vld [vmem:[#allocation6 + $0x20] sm:$0xff]
    %v1252 = vld [vmem:[#allocation6 + $0x28] sm:$0xff]
    %v1253 = vld [vmem:[#allocation6 + $0x30] sm:$0xff]
    %v1254 = vld [vmem:[#allocation6 + $0x38] sm:$0xff]
    %v1255 = vld [vmem:[#allocation6 + $0x40] sm:$0xff]
    %v1256 = vld [vmem:[#allocation6 + $0x48] sm:$0xff]
    %v1257 = vld [vmem:[#allocation6 + $0x50] sm:$0xff]
    %v1258 = vld [vmem:[#allocation6 + $0x58] sm:$0xff]
    %v1259 = vld [vmem:[#allocation6 + $0x60] sm:$0xff]
    %v1260 = vld [vmem:[#allocation6 + $0x68] sm:$0xff]
    %v1261 = vld [vmem:[#allocation6 + $0x70] sm:$0xff]
    %v1262 = vld [vmem:[#allocation6 + $0x78] sm:$0xff]
    %v1263 = vld [vmem:[#allocation6 + $0x80] sm:$0xff]
    %v1264 = vld [vmem:[#allocation6 + $0x88] sm:$0xff]
    %v1265 = vld [vmem:[#allocation6 + $0x90] sm:$0xff]
    %v1266 = vld [vmem:[#allocation6 + $0x98] sm:$0xff]
    %v1267 = vld [vmem:[#allocation6 + $0xa0] sm:$0xff]
    %v1268 = vld [vmem:[#allocation6 + $0xa8] sm:$0xff]
    %v1269 = vld [vmem:[#allocation6 + $0xb0] sm:$0xff]
    %v1270 = vld [vmem:[#allocation6 + $0xb8] sm:$0xff]
    %v1271 = vld [vmem:[#allocation6 + $0xc0] sm:$0xff]
    %v1272 = vld [vmem:[#allocation6 + $0xc8] sm:$0xff]
    %v1273 = vld [vmem:[#allocation6 + $0xd0] sm:$0xff]
    %v1274 = vld [vmem:[#allocation6 + $0xd8] sm:$0xff]
    %v1275 = vld [vmem:[#allocation6 + $0xe0] sm:$0xff]
    %v1276 = vld [vmem:[#allocation6 + $0xe8] sm:$0xff]
    %v1277 = vld [vmem:[#allocation6 + $0xf0] sm:$0xff]
    %v1278 = vld [vmem:[#allocation6 + $0xf8] sm:$0xff]
    %v1279 = vld [vmem:[#allocation6 + $0x100] sm:$0xff]
    %v1280 = vld [vmem:[#allocation6 + $0x108] sm:$0xff]
    %v1281 = vld [vmem:[#allocation6 + $0x110] sm:$0xff]
    %v1282 = vld [vmem:[#allocation6 + $0x118] sm:$0xff]
    %v1283 = vld [vmem:[#allocation6 + $0x120] sm:$0xff]
    %v1284 = vld [vmem:[#allocation6 + $0x128] sm:$0xff]
    %v1285 = vld [vmem:[#allocation6 + $0x130] sm:$0xff]
    %v1286 = vld [vmem:[#allocation6 + $0x138] sm:$0xff]
    %v1287 = vld [vmem:[#allocation6 + $0x140] sm:$0xff]
    %v1288 = vld [vmem:[#allocation6 + $0x148] sm:$0xff]
    %v1289 = vld [vmem:[#allocation6 + $0x150] sm:$0xff]
    %v1290 = vld [vmem:[#allocation6 + $0x158] sm:$0xff]
    %v1291 = vld [vmem:[#allocation6 + $0x160] sm:$0xff]
    %v1292 = vld [vmem:[#allocation6 + $0x168] sm:$0xff]
    %v1293 = vld [vmem:[#allocation6 + $0x170] sm:$0xff]
    %v1294 = vld [vmem:[#allocation6 + $0x178] sm:$0xff]
    %v1295 = vld [vmem:[#allocation6 + $0x180] sm:$0xff]
    %v1296 = vld [vmem:[#allocation6 + $0x188] sm:$0xff]
    %v1297 = vld [vmem:[#allocation6 + $0x190] sm:$0xff]
    %v1298 = vld [vmem:[#allocation6 + $0x198] sm:$0xff]
    %v1299 = vld [vmem:[#allocation6 + $0x1a0] sm:$0xff]
    %v1300 = vld [vmem:[#allocation6 + $0x1a8] sm:$0xff]
    %v1301 = vld [vmem:[#allocation6 + $0x1b0] sm:$0xff]
    %v1302 = vld [vmem:[#allocation6 + $0x1b8] sm:$0xff]
    %v1303 = vld [vmem:[#allocation6 + $0x1c0] sm:$0xff]
    %v1304 = vld [vmem:[#allocation6 + $0x1c8] sm:$0xff]
    %v1305 = vld [vmem:[#allocation6 + $0x1d0] sm:$0xff]
    %v1306 = vld [vmem:[#allocation6 + $0x1d8] sm:$0xff]
    %v1307 = vld [vmem:[#allocation6 + $0x1e0] sm:$0xff]
    %v1308 = vld [vmem:[#allocation6 + $0x1e8] sm:$0xff]
    %v1309 = vld [vmem:[#allocation6 + $0x1f0] sm:$0xff]
    %v1310 = vld [vmem:[#allocation6 + $0x1f8] sm:$0xff]
    %v1311 = vld [vmem:[#allocation6 + $0x200] sm:$0xff]
    %v1312 = vld [vmem:[#allocation6 + $0x208] sm:$0xff]
    %v1313 = vld [vmem:[#allocation6 + $0x210] sm:$0xff]
    %v1314 = vld [vmem:[#allocation6 + $0x218] sm:$0xff]
    %v1315 = vld [vmem:[#allocation6 + $0x220] sm:$0xff]
    %v1316 = vld [vmem:[#allocation6 + $0x228] sm:$0xff]
    %v1317 = vld [vmem:[#allocation6 + $0x230] sm:$0xff]
    %v1318 = vld [vmem:[#allocation6 + $0x238] sm:$0xff]
    %v1319 = vld [vmem:[#allocation6 + $0x240] sm:$0xff]
    %v1320 = vld [vmem:[#allocation6 + $0x248] sm:$0xff]
    %v1321 = vld [vmem:[#allocation6 + $0x250] sm:$0xff]
    %v1322 = vld [vmem:[#allocation6 + $0x258] sm:$0xff]
    %v1323 = vld [vmem:[#allocation6 + $0x260] sm:$0xff]
    %v1324 = vld [vmem:[#allocation6 + $0x268] sm:$0xff]
    %v1325 = vld [vmem:[#allocation6 + $0x270] sm:$0xff]
    %v1326 = vld [vmem:[#allocation6 + $0x278] sm:$0xff]
    %v1327 = vld [vmem:[#allocation6 + $0x280] sm:$0xff]
    %v1328 = vld [vmem:[#allocation6 + $0x288] sm:$0xff]
    %v1329 = vld [vmem:[#allocation6 + $0x290] sm:$0xff]
    %v1330 = vld [vmem:[#allocation6 + $0x298] sm:$0xff]
    %v1331 = vld [vmem:[#allocation6 + $0x2a0] sm:$0xff]
    %v1332 = vld [vmem:[#allocation6 + $0x2a8] sm:$0xff]
    %v1333 = vld [vmem:[#allocation6 + $0x2b0] sm:$0xff]
    %v1334 = vld [vmem:[#allocation6 + $0x2b8] sm:$0xff]
    %v1335 = vld [vmem:[#allocation6 + $0x2c0] sm:$0xff]
    %v1336 = vld [vmem:[#allocation6 + $0x2c8] sm:$0xff]
    %v1337 = vld [vmem:[#allocation6 + $0x2d0] sm:$0xff]
    %v1338 = vld [vmem:[#allocation6 + $0x2d8] sm:$0xff]
    %v1339 = vld [vmem:[#allocation6 + $0x2e0] sm:$0xff]
    %v1340 = vld [vmem:[#allocation6 + $0x2e8] sm:$0xff]
    %v1341 = vld [vmem:[#allocation6 + $0x2f0] sm:$0xff]
    %v1342 = vld [vmem:[#allocation6 + $0x2f8] sm:$0xff]
    %v1343 = vld [vmem:[#allocation6 + $0x300] sm:$0xff]
    %v1344 = vld [vmem:[#allocation6 + $0x308] sm:$0xff]
    %v1345 = vld [vmem:[#allocation6 + $0x310] sm:$0xff]
    %v1346 = vld [vmem:[#allocation6 + $0x318] sm:$0xff]
    %v1347 = vld [vmem:[#allocation6 + $0x320] sm:$0xff]
    %v1348 = vld [vmem:[#allocation6 + $0x328] sm:$0xff]
    %v1349 = vld [vmem:[#allocation6 + $0x330] sm:$0xff]
    %v1350 = vld [vmem:[#allocation6 + $0x338] sm:$0xff]
    %v1351 = vld [vmem:[#allocation6 + $0x340] sm:$0xff]
    %v1352 = vld [vmem:[#allocation6 + $0x348] sm:$0xff]
    %v1353 = vld [vmem:[#allocation6 + $0x350] sm:$0xff]
    %v1354 = vld [vmem:[#allocation6 + $0x358] sm:$0xff]
    %v1355 = vld [vmem:[#allocation6 + $0x360] sm:$0xff]
    %v1356 = vld [vmem:[#allocation6 + $0x368] sm:$0xff]
    %v1357 = vld [vmem:[#allocation6 + $0x370] sm:$0xff]
    %v1358 = vld [vmem:[#allocation6 + $0x378] sm:$0xff]
    %v1359 = vld [vmem:[#allocation6 + $0x380] sm:$0xff]
    %v1360 = vld [vmem:[#allocation6 + $0x388] sm:$0xff]
    %v1361 = vld [vmem:[#allocation6 + $0x390] sm:$0xff]
    %v1362 = vld [vmem:[#allocation6 + $0x398] sm:$0xff]
    %v1363 = vld [vmem:[#allocation6 + $0x3a0] sm:$0xff]
    %v1364 = vld [vmem:[#allocation6 + $0x3a8] sm:$0xff]
    %v1365 = vld [vmem:[#allocation6 + $0x3b0] sm:$0xff]
    %v1366 = vld [vmem:[#allocation6 + $0x3b8] sm:$0xff]
    %v1367 = vld [vmem:[#allocation6 + $0x3c0] sm:$0xff]
    %v1368 = vld [vmem:[#allocation6 + $0x3c8] sm:$0xff]
    %v1369 = vld [vmem:[#allocation6 + $0x3d0] sm:$0xff]
    %v1370 = vld [vmem:[#allocation6 + $0x3d8] sm:$0xff]
    %v1371 = vld [vmem:[#allocation6 + $0x3e0] sm:$0xff]
    %v1372 = vld [vmem:[#allocation6 + $0x3e8] sm:$0xff]
    %v1373 = vld [vmem:[#allocation6 + $0x3f0] sm:$0xff]
    %v1374 = vld [vmem:[#allocation6 + $0x3f8] sm:$0xff]
    %v1375 = vld [vmem:[#allocation7] sm:$0x3]
    %v1377 = vlaneseq
    %v1378 = vshrl.u32 %v1377, 7
    %v1379 = vsub.s32 0, %v1378
    %v1380 = vrot.slane %v1375, %v1379
    %v1381 = vlaneseq
    %v1382 = vshrl.u32 %v1381, 7
    %v1383 = vsub.s32 1, %v1382
    %v1384 = vrot.slane %v1375, %v1383
    %1387 = vmatprep.subr.mxu0 %v1278
    %1388 = vmatpush1.msra.mxu0 %v1277
    %1389 = vmatprep.subr.mxu0 %v1276
    %1390 = vmatpush1.msra.mxu0 %v1275
    %1391 = vmatprep.subr.mxu0 %v1274
    %1392 = vmatpush1.msra.mxu0 %v1273
    %1393 = vmatprep.subr.mxu0 %v1272
    %1394 = vmatpush1.msra.mxu0 %v1271
    %1395 = vmatprep.subr.mxu0 %v1270
    %1396 = vmatpush1.msra.mxu0 %v1269
    %1397 = vmatprep.subr.mxu0 %v1268
    %1398 = vmatpush1.msra.mxu0 %v1267
    %1399 = vmatprep.subr.mxu0 %v1266
    %1400 = vmatpush1.msra.mxu0 %v1265
    %1401 = vmatprep.subr.mxu0 %v1264
    %1402 = vmatpush1.msra.mxu0 %v1263
    %1403 = vmatprep.subr.mxu0 %v1262
    %1404 = vmatpush1.msra.mxu0 %v1261
    %1405 = vmatprep.subr.mxu0 %v1260
    %1406 = vmatpush1.msra.mxu0 %v1259
    %1407 = vmatprep.subr.mxu0 %v1258
    %1408 = vmatpush1.msra.mxu0 %v1257
    %1409 = vmatprep.subr.mxu0 %v1256
    %1410 = vmatpush1.msra.mxu0 %v1255
    %1411 = vmatprep.subr.mxu0 %v1254
    %1412 = vmatpush1.msra.mxu0 %v1253
    %1413 = vmatprep.subr.mxu0 %v1252
    %1414 = vmatpush1.msra.mxu0 %v1251
    %1415 = vmatprep.subr.mxu0 %v1250
    %1416 = vmatpush1.msra.mxu0 %v1249
    %1417 = vmatprep.subr.mxu0 %v1248
    %1418 = vmatpush1.msra.mxu0 %v1247
    %1419 = vmatprep.subr.mxu0 %v1310
    %1420 = vmatpush2.msra.mxu0 %v1309
    %1421 = vmatprep.subr.mxu0 %v1308
    %1422 = vmatpush2.msra.mxu0 %v1307
    %1423 = vmatprep.subr.mxu0 %v1306
    %1424 = vmatpush2.msra.mxu0 %v1305
    %1425 = vmatprep.subr.mxu0 %v1304
    %1426 = vmatpush2.msra.mxu0 %v1303
    %1427 = vmatprep.subr.mxu0 %v1302
    %1428 = vmatpush2.msra.mxu0 %v1301
    %1429 = vmatprep.subr.mxu0 %v1300
    %1430 = vmatpush2.msra.mxu0 %v1299
    %1431 = vmatprep.subr.mxu0 %v1298
    %1432 = vmatpush2.msra.mxu0 %v1297
    %1433 = vmatprep.subr.mxu0 %v1296
    %1434 = vmatpush2.msra.mxu0 %v1295
    %1435 = vmatprep.subr.mxu0 %v1294
    %1436 = vmatpush2.msra.mxu0 %v1293
    %1437 = vmatprep.subr.mxu0 %v1292
    %1438 = vmatpush2.msra.mxu0 %v1291
    %1439 = vmatprep.subr.mxu0 %v1290
    %1440 = vmatpush2.msra.mxu0 %v1289
    %1441 = vmatprep.subr.mxu0 %v1288
    %1442 = vmatpush2.msra.mxu0 %v1287
    %1443 = vmatprep.subr.mxu0 %v1286
    %1444 = vmatpush2.msra.mxu0 %v1285
    %1445 = vmatprep.subr.mxu0 %v1284
    %1446 = vmatpush2.msra.mxu0 %v1283
    %1447 = vmatprep.subr.mxu0 %v1282
    %1448 = vmatpush2.msra.mxu0 %v1281
    %1449 = vmatprep.subr.mxu0 %v1280
    %1450 = vmatpush2.msra.mxu0 %v1279
    %1451 = vmatprep.mubr.f32.mxu0 %v1244
    %1452 = vmatmul.mubr.f32.gmra.mxu0 %v1243
    %v1453 = vpop.f32.mrf.mxu0
    %v1454 = vadd.f32 %v1380, %v1453
    %v1455 = vpop.f32.mrf.mxu0
    %v1456 = vadd.f32 %v1384, %v1455
    %1457 = vdwg.mxu0
    %1458 = vmatprep.subr.mxu0 %v1342
    %1459 = vmatpush1.msra.mxu0 %v1341
    %1460 = vmatprep.subr.mxu0 %v1340
    %1461 = vmatpush1.msra.mxu0 %v1339
    %1462 = vmatprep.subr.mxu0 %v1338
    %1463 = vmatpush1.msra.mxu0 %v1337
    %1464 = vmatprep.subr.mxu0 %v1336
    %1465 = vmatpush1.msra.mxu0 %v1335
    %1466 = vmatprep.subr.mxu0 %v1334
    %1467 = vmatpush1.msra.mxu0 %v1333
    %1468 = vmatprep.subr.mxu0 %v1332
    %1469 = vmatpush1.msra.mxu0 %v1331
    %1470 = vmatprep.subr.mxu0 %v1330
    %1471 = vmatpush1.msra.mxu0 %v1329
    %1472 = vmatprep.subr.mxu0 %v1328
    %1473 = vmatpush1.msra.mxu0 %v1327
    %1474 = vmatprep.subr.mxu0 %v1326
    %1475 = vmatpush1.msra.mxu0 %v1325
    %1476 = vmatprep.subr.mxu0 %v1324
    %1477 = vmatpush1.msra.mxu0 %v1323
    %1478 = vmatprep.subr.mxu0 %v1322
    %1479 = vmatpush1.msra.mxu0 %v1321
    %1480 = vmatprep.subr.mxu0 %v1320
    %1481 = vmatpush1.msra.mxu0 %v1319
    %1482 = vmatprep.subr.mxu0 %v1318
    %1483 = vmatpush1.msra.mxu0 %v1317
    %1484 = vmatprep.subr.mxu0 %v1316
    %1485 = vmatpush1.msra.mxu0 %v1315
    %1486 = vmatprep.subr.mxu0 %v1314
    %1487 = vmatpush1.msra.mxu0 %v1313
    %1488 = vmatprep.subr.mxu0 %v1312
    %1489 = vmatpush1.msra.mxu0 %v1311
    %1490 = vmatprep.subr.mxu0 %v1374
    %1491 = vmatpush2.msra.mxu0 %v1373
    %1492 = vmatprep.subr.mxu0 %v1372
    %1493 = vmatpush2.msra.mxu0 %v1371
    %1494 = vmatprep.subr.mxu0 %v1370
    %1495 = vmatpush2.msra.mxu0 %v1369
    %1496 = vmatprep.subr.mxu0 %v1368
    %1497 = vmatpush2.msra.mxu0 %v1367
    %1498 = vmatprep.subr.mxu0 %v1366
    %1499 = vmatpush2.msra.mxu0 %v1365
    %1500 = vmatprep.subr.mxu0 %v1364
    %1501 = vmatpush2.msra.mxu0 %v1363
    %1502 = vmatprep.subr.mxu0 %v1362
    %1503 = vmatpush2.msra.mxu0 %v1361
    %1504 = vmatprep.subr.mxu0 %v1360
    %1505 = vmatpush2.msra.mxu0 %v1359
    %1506 = vmatprep.subr.mxu0 %v1358
    %1507 = vmatpush2.msra.mxu0 %v1357
    %1508 = vmatprep.subr.mxu0 %v1356
    %1509 = vmatpush2.msra.mxu0 %v1355
    %1510 = vmatprep.subr.mxu0 %v1354
    %1511 = vmatpush2.msra.mxu0 %v1353
    %1512 = vmatprep.subr.mxu0 %v1352
    %1513 = vmatpush2.msra.mxu0 %v1351
    %1514 = vmatprep.subr.mxu0 %v1350
    %1515 = vmatpush2.msra.mxu0 %v1349
    %1516 = vmatprep.subr.mxu0 %v1348
    %1517 = vmatpush2.msra.mxu0 %v1347
    %1518 = vmatprep.subr.mxu0 %v1346
    %1519 = vmatpush2.msra.mxu0 %v1345
    %1520 = vmatprep.subr.mxu0 %v1344
    %1521 = vmatpush2.msra.mxu0 %v1343
    %1522 = vmatprep.mubr.f32.mxu0 %v1246
    %1523 = vmatmul.mubr.f32.gmra.mxu0 %v1245
    %v1524 = vpop.f32.mrf.mxu0
    %v1525 = vadd.f32 %v1454, %v1524
    %v1526 = vpop.f32.mrf.mxu0
    %v1527 = vadd.f32 %v1456, %v1526
    %1528 = vdwg.mxu0
    %v1529 = vmax.f32 %v1525, 0.0
    %v1530 = vmax.f32 %v1527, 0.0
    %v1531 = vld [vmem:[#allocation9] sm:$0xff]
    %v1532 = vld [vmem:[#allocation9 + $0x8] sm:$0xff]
    %v1533 = vld [vmem:[#allocation9 + $0x10] sm:$0xff]
    %v1534 = vld [vmem:[#allocation9 + $0x18] sm:$0xff]
    %v1535 = vld [vmem:[#allocation9 + $0x20] sm:$0xff]
    %v1536 = vld [vmem:[#allocation9 + $0x28] sm:$0xff]
    %v1537 = vld [vmem:[#allocation9 + $0x30] sm:$0xff]
    %v1538 = vld [vmem:[#allocation9 + $0x38] sm:$0xff]
    %v1539 = vld [vmem:[#allocation9 + $0x40] sm:$0xff]
    %v1540 = vld [vmem:[#allocation9 + $0x48] sm:$0xff]
    %v1541 = vld [vmem:[#allocation9 + $0x50] sm:$0xff]
    %v1542 = vld [vmem:[#allocation9 + $0x58] sm:$0xff]
    %v1543 = vld [vmem:[#allocation9 + $0x60] sm:$0xff]
    %v1544 = vld [vmem:[#allocation9 + $0x68] sm:$0xff]
    %v1545 = vld [vmem:[#allocation9 + $0x70] sm:$0xff]
    %v1546 = vld [vmem:[#allocation9 + $0x78] sm:$0xff]
    %v1547 = vld [vmem:[#allocation9 + $0x80] sm:$0xff]
    %v1548 = vld [vmem:[#allocation9 + $0x88] sm:$0xff]
    %v1549 = vld [vmem:[#allocation9 + $0x90] sm:$0xff]
    %v1550 = vld [vmem:[#allocation9 + $0x98] sm:$0xff]
    %v1551 = vld [vmem:[#allocation9 + $0xa0] sm:$0xff]
    %v1552 = vld [vmem:[#allocation9 + $0xa8] sm:$0xff]
    %v1553 = vld [vmem:[#allocation9 + $0xb0] sm:$0xff]
    %v1554 = vld [vmem:[#allocation9 + $0xb8] sm:$0xff]
    %v1555 = vld [vmem:[#allocation9 + $0xc0] sm:$0xff]
    %v1556 = vld [vmem:[#allocation9 + $0xc8] sm:$0xff]
    %v1557 = vld [vmem:[#allocation9 + $0xd0] sm:$0xff]
    %v1558 = vld [vmem:[#allocation9 + $0xd8] sm:$0xff]
    %v1559 = vld [vmem:[#allocation9 + $0xe0] sm:$0xff]
    %v1560 = vld [vmem:[#allocation9 + $0xe8] sm:$0xff]
    %v1561 = vld [vmem:[#allocation9 + $0xf0] sm:$0xff]
    %v1562 = vld [vmem:[#allocation9 + $0xf8] sm:$0xff]
    %v1563 = vld [vmem:[#allocation10] sm:$0x1]
    %v1565 = vlaneseq
    %v1566 = vshrl.u32 %v1565, 7
    %v1567 = vsub.s32 0, %v1566
    %v1568 = vrot.slane %v1563, %v1567
    %1570 = vmatprep.subr.mxu0 0.0
    %1571 = vmatpush1.msra.mxu0 %v1546
    %1572 = vmatprep.subr.mxu0 0.0
    %1573 = vmatpush1.msra.mxu0 %v1545
    %1574 = vmatprep.subr.mxu0 0.0
    %1575 = vmatpush1.msra.mxu0 %v1544
    %1576 = vmatprep.subr.mxu0 0.0
    %1577 = vmatpush1.msra.mxu0 %v1543
    %1578 = vmatprep.subr.mxu0 0.0
    %1579 = vmatpush1.msra.mxu0 %v1542
    %1580 = vmatprep.subr.mxu0 0.0
    %1581 = vmatpush1.msra.mxu0 %v1541
    %1582 = vmatprep.subr.mxu0 0.0
    %1583 = vmatpush1.msra.mxu0 %v1540
    %1584 = vmatprep.subr.mxu0 0.0
    %1585 = vmatpush1.msra.mxu0 %v1539
    %1586 = vmatprep.subr.mxu0 0.0
    %1587 = vmatpush1.msra.mxu0 %v1538
    %1588 = vmatprep.subr.mxu0 0.0
    %1589 = vmatpush1.msra.mxu0 %v1537
    %1590 = vmatprep.subr.mxu0 0.0
    %1591 = vmatpush1.msra.mxu0 %v1536
    %1592 = vmatprep.subr.mxu0 0.0
    %1593 = vmatpush1.msra.mxu0 %v1535
    %1594 = vmatprep.subr.mxu0 0.0
    %1595 = vmatpush1.msra.mxu0 %v1534
    %1596 = vmatprep.subr.mxu0 0.0
    %1597 = vmatpush1.msra.mxu0 %v1533
    %1598 = vmatprep.subr.mxu0 0.0
    %1599 = vmatpush1.msra.mxu0 %v1532
    %1600 = vmatprep.subr.mxu0 0.0
    %1601 = vmatpush1.msra.mxu0 %v1531
    %1602 = vmatprep.subr.mxu0 0.0
    %1603 = vmatpush2.msra.mxu0 %v1562
    %1604 = vmatprep.subr.mxu0 0.0
    %1605 = vmatpush2.msra.mxu0 %v1561
    %1606 = vmatprep.subr.mxu0 0.0
    %1607 = vmatpush2.msra.mxu0 %v1560
    %1608 = vmatprep.subr.mxu0 0.0
    %1609 = vmatpush2.msra.mxu0 %v1559
    %1610 = vmatprep.subr.mxu0 0.0
    %1611 = vmatpush2.msra.mxu0 %v1558
    %1612 = vmatprep.subr.mxu0 0.0
    %1613 = vmatpush2.msra.mxu0 %v1557
    %1614 = vmatprep.subr.mxu0 0.0
    %1615 = vmatpush2.msra.mxu0 %v1556
    %1616 = vmatprep.subr.mxu0 0.0
    %1617 = vmatpush2.msra.mxu0 %v1555
    %1618 = vmatprep.subr.mxu0 0.0
    %1619 = vmatpush2.msra.mxu0 %v1554
    %1620 = vmatprep.subr.mxu0 0.0
    %1621 = vmatpush2.msra.mxu0 %v1553
    %1622 = vmatprep.subr.mxu0 0.0
    %1623 = vmatpush2.msra.mxu0 %v1552
    %1624 = vmatprep.subr.mxu0 0.0
    %1625 = vmatpush2.msra.mxu0 %v1551
    %1626 = vmatprep.subr.mxu0 0.0
    %1627 = vmatpush2.msra.mxu0 %v1550
    %1628 = vmatprep.subr.mxu0 0.0
    %1629 = vmatpush2.msra.mxu0 %v1549
    %1630 = vmatprep.subr.mxu0 0.0
    %1631 = vmatpush2.msra.mxu0 %v1548
    %1632 = vmatprep.subr.mxu0 0.0
    %1633 = vmatpush2.msra.mxu0 %v1547
    %1634 = vmatprep.mubr.f32.mxu0 %v1530
    %1635 = vmatmul.mubr.f32.gmra.mxu0 %v1529
    %v1636 = vpop.f32.mrf.mxu0
    %v1637 = vadd.f32 %v1568, %v1636
    %v1638 = vpop.f32.mrf.mxu0
    %1639 = vdwg.mxu0
    %v1640 = vmax.f32 %v1637, 0.0
    %v1641 = vld [vmem:[#allocation12] sm:$0xff]
    %v1642 = vld [vmem:[#allocation12 + $0x8] sm:$0xff]
    %v1643 = vld [vmem:[#allocation12 + $0x10] sm:$0xff]
    %v1644 = vld [vmem:[#allocation12 + $0x18] sm:$0xff]
    %v1645 = vld [vmem:[#allocation12 + $0x20] sm:$0xff]
    %v1646 = vld [vmem:[#allocation12 + $0x28] sm:$0xff]
    %v1647 = vld [vmem:[#allocation12 + $0x30] sm:$0xff]
    %v1648 = vld [vmem:[#allocation12 + $0x38] sm:$0xff]
    %v1649 = vld [vmem:[#allocation12 + $0x40] sm:$0xff]
    %v1650 = vld [vmem:[#allocation12 + $0x48] sm:$0xff]
    %v1651 = vld [vmem:[#allocation12 + $0x50] sm:$0xff]
    %v1652 = vld [vmem:[#allocation12 + $0x58] sm:$0xff]
    %v1653 = vld [vmem:[#allocation12 + $0x60] sm:$0xff]
    %v1654 = vld [vmem:[#allocation12 + $0x68] sm:$0xff]
    %v1655 = vld [vmem:[#allocation12 + $0x70] sm:$0xff]
    %v1656 = vld [vmem:[#allocation12 + $0x78] sm:$0xff]
    %v1657 = vld [vmem:[#allocation13] sm:$0x1]
    %v1659 = vlaneseq
    %v1660 = vshrl.u32 %v1659, 7
    %v1661 = vsub.s32 0, %v1660
    %v1662 = vrot.slane %v1657, %v1661
    %1664 = vmatprep.subr.mxu0 0.0
    %1665 = vmatpush1.msra.mxu0 %v1656
    %1666 = vmatprep.subr.mxu0 0.0
    %1667 = vmatpush1.msra.mxu0 %v1655
    %1668 = vmatprep.subr.mxu0 0.0
    %1669 = vmatpush1.msra.mxu0 %v1654
    %1670 = vmatprep.subr.mxu0 0.0
    %1671 = vmatpush1.msra.mxu0 %v1653
    %1672 = vmatprep.subr.mxu0 0.0
    %1673 = vmatpush1.msra.mxu0 %v1652
    %1674 = vmatprep.subr.mxu0 0.0
    %1675 = vmatpush1.msra.mxu0 %v1651
    %1676 = vmatprep.subr.mxu0 0.0
    %1677 = vmatpush1.msra.mxu0 %v1650
    %1678 = vmatprep.subr.mxu0 0.0
    %1679 = vmatpush1.msra.mxu0 %v1649
    %1680 = vmatprep.subr.mxu0 0.0
    %1681 = vmatpush1.msra.mxu0 %v1648
    %1682 = vmatprep.subr.mxu0 0.0
    %1683 = vmatpush1.msra.mxu0 %v1647
    %1684 = vmatprep.subr.mxu0 0.0
    %1685 = vmatpush1.msra.mxu0 %v1646
    %1686 = vmatprep.subr.mxu0 0.0
    %1687 = vmatpush1.msra.mxu0 %v1645
    %1688 = vmatprep.subr.mxu0 0.0
    %1689 = vmatpush1.msra.mxu0 %v1644
    %1690 = vmatprep.subr.mxu0 0.0
    %1691 = vmatpush1.msra.mxu0 %v1643
    %1692 = vmatprep.subr.mxu0 0.0
    %1693 = vmatpush1.msra.mxu0 %v1642
    %1694 = vmatprep.subr.mxu0 0.0
    %1695 = vmatpush1.msra.mxu0 %v1641
    %1696 = vmatprep.subr.mxu0 0.0
    %1697 = vmatpush2.msra.mxu0 0.0
    %1698 = vmatprep.subr.mxu0 0.0
    %1699 = vmatpush2.msra.mxu0 0.0
    %1700 = vmatprep.subr.mxu0 0.0
    %1701 = vmatpush2.msra.mxu0 0.0
    %1702 = vmatprep.subr.mxu0 0.0
    %1703 = vmatpush2.msra.mxu0 0.0
    %1704 = vmatprep.subr.mxu0 0.0
    %1705 = vmatpush2.msra.mxu0 0.0
    %1706 = vmatprep.subr.mxu0 0.0
    %1707 = vmatpush2.msra.mxu0 0.0
    %1708 = vmatprep.subr.mxu0 0.0
    %1709 = vmatpush2.msra.mxu0 0.0
    %1710 = vmatprep.subr.mxu0 0.0
    %1711 = vmatpush2.msra.mxu0 0.0
    %1712 = vmatprep.subr.mxu0 0.0
    %1713 = vmatpush2.msra.mxu0 0.0
    %1714 = vmatprep.subr.mxu0 0.0
    %1715 = vmatpush2.msra.mxu0 0.0
    %1716 = vmatprep.subr.mxu0 0.0
    %1717 = vmatpush2.msra.mxu0 0.0
    %1718 = vmatprep.subr.mxu0 0.0
    %1719 = vmatpush2.msra.mxu0 0.0
    %1720 = vmatprep.subr.mxu0 0.0
    %1721 = vmatpush2.msra.mxu0 0.0
    %1722 = vmatprep.subr.mxu0 0.0
    %1723 = vmatpush2.msra.mxu0 0.0
    %1724 = vmatprep.subr.mxu0 0.0
    %1725 = vmatpush2.msra.mxu0 0.0
    %1726 = vmatprep.subr.mxu0 0.0
    %1727 = vmatpush2.msra.mxu0 0.0
    %1728 = vmatprep.mubr.f32.mxu0 0.0
    %1729 = vmatmul.mubr.f32.gmra.mxu0 %v1640
    %v1730 = vpop.f32.mrf.mxu0
    %v1731 = vadd.f32 %v1662, %v1730
    %v1732 = vpop.f32.mrf.mxu0
    %1733 = vdwg.mxu0
    %v1734 = vmax.f32 %v1731, 0.0
    %1735 = vst [vmem:[%s9] sm:$0xff] %v1734
    // Predicated region
    $region70: #{conv_mlp_trunk_forward.1} parent=1 // pred_check
      _
    $region71: #{conv_mlp_trunk_forward.1} parent=1 // pred_check_branch
      %1737 = sbr.rel (0) target = $region73
    $region72: #{conv_mlp_trunk_forward.1} parent=1 // pred_region
      _
    $region73: #{conv_mlp_trunk_forward.1} parent=1 // pred_fallthru
      _
    // Predicated region
    $region74: #{conv_mlp_trunk_forward.1} parent=1 // pred_check
      _
    $region75: #{conv_mlp_trunk_forward.1} parent=1 // pred_check_branch
      %1739 = sbr.rel (0) target = $region77
    $region76: #{conv_mlp_trunk_forward.1} parent=1 // pred_region
      _
    $region77: #{conv_mlp_trunk_forward.1} parent=1 // pred_fallthru
      _
    %1740 = vsyncpa [#allocation3], 1
    %1741 = vsyncpa [#allocation5], 1
    %1742 = vsyncpa [#allocation8], 1
    %1743 = vsyncpa [#allocation11], 1
    %1744 = vsyncpa [#allocation14], 1

</llo_original>
